<compile_context>
chip_gen: v7x
topology: tpu7x:2x2x1
jax: 0.10.0
libtpu: 0.0.40
codegen_flags: <defaults>
</compile_context>

<pallas_src>
import functools

import jax
import jax.numpy as jnp
from jax import lax
from jax.experimental import pallas as pl
from jax.experimental.pallas import tpu as pltpu

EPS = 1e-5  # nn.BatchNorm2d default eps


# ---------------------------------------------------------------------------
# Fused kernel: per-batch  (per-head proj -> attention -> out-proj accumulate)
# ---------------------------------------------------------------------------
def _fused_attention_kernel(x_ref,
                            wq_ref, bq_ref,     # (H, dim, dh), (H, 1, dh)  [scale folded]
                            wk_ref, bk_ref,     # (H, dim, dh), (H, 1, dh)
                            wv_ref, bv_ref,     # (H, dim, dh), (H, 1, dh)
                            wo_ref, bo_ref,     # (H, dh, dim), (1, dim)
                            o_ref,
                            *, heads):
    cdt = wq_ref.dtype                      # matmul operand dtype (f32 or bf16)
    x = x_ref[0]                            # (N, dim), already in cdt

    out = bo_ref[...]                       # (1, dim) f32; broadcasts on first add

    for h in range(heads):                  # static unroll (heads is small)
        # ---- per-head folded projections: leading-axis weight indexing only
        qh = jnp.dot(x, wq_ref[h], preferred_element_type=jnp.float32) + bq_ref[h]
        kh = jnp.dot(x, wk_ref[h], preferred_element_type=jnp.float32) + bk_ref[h]
        vh = jnp.dot(x, wv_ref[h], preferred_element_type=jnp.float32) + bv_ref[h]

        # ---- scaled-dot-product attention (scale pre-folded into Wq / bq)
        dots = lax.dot_general(qh.astype(cdt), kh.astype(cdt),
                               (((1,), (1,)), ((), ())),
                               preferred_element_type=jnp.float32)      # (N, N)
        dots = dots - jnp.max(dots, axis=-1, keepdims=True)             # f32 numerics
        e = jnp.exp(dots)
        inv = pl.reciprocal(jnp.sum(e, axis=-1, keepdims=True), approx=True)
        probs = (e * inv).astype(cdt)                                   # softmax(dim=-1)

        oh = jnp.dot(probs, vh.astype(cdt),
                     preferred_element_type=jnp.float32)                # (N, dh)

        # ---- output 1x1 conv, accumulated per head (no head concat) --------
        out = out + jnp.dot(oh.astype(cdt), wo_ref[h],
                            preferred_element_type=jnp.float32)         # (N, dim)

    o_ref[0] = out.astype(o_ref.dtype)


# ---------------------------------------------------------------------------
# Wrapper
# ---------------------------------------------------------------------------
def _fold_conv_bn_conv(w1, g, b, m, v, w2):
    """conv1x1(no bias) -> BN(inference) -> conv1x1(no bias)  ==>  x @ W + B."""
    a = g * lax.rsqrt(v + EPS)              # (1, dim)
    w_eff = (w1 * a) @ w2                   # scale conv1 output channels, fold conv2
    b_eff = (b - m * a) @ w2                # (1, out)
    return w_eff, b_eff


def _split_heads_w(w, heads, dim_head):
    """(dim, heads*dim_head) -> (heads, dim, dim_head)  (channel order: h major)."""
    dim = w.shape[0]
    return jnp.transpose(w.reshape(dim, heads, dim_head), (1, 0, 2))


def _split_heads_b(b, heads, dim_head):
    """(1, heads*dim_head) -> (heads, 1, dim_head)."""
    return jnp.transpose(b.reshape(1, heads, dim_head), (1, 0, 2))


def attention_forward(x_nchw, params, *, heads, dim_head,
                      matmul_dtype=jnp.bfloat16):
    b, dim, H, W = x_nchw.shape
    N = H * W
    inner = heads * dim_head
    scale = dim_head ** -0.5

    # NCHW -> (B, N, C) token layout (all convs are 1x1 => per-token matmuls)
    x = jnp.transpose(x_nchw.reshape(b, dim, N), (0, 2, 1))

    # Fold the BN + double-conv chains into single effective weights/biases.
    wq_eff, bq_eff = _fold_conv_bn_conv(params['wq1'], params['gq'], params['bq'],
                                        params['mq'], params['vq'], params['wq2'])
    wkv_eff, bkv_eff = _fold_conv_bn_conv(params['wkv1'], params['gkv'], params['bkv'],
                                          params['mkv'], params['vkv'], params['wkv2'])
    # Fold the attention scale into the Q projection (saves an (N,N) VPU scale).
    wq_eff = wq_eff * scale
    bq_eff = bq_eff * scale
    # chunk(2, dim=1) of kv == column split of the folded weight.
    wk_eff, wv_eff = wkv_eff[:, :inner], wkv_eff[:, inner:]
    bk_eff, bv_eff = bkv_eff[:, :inner], bkv_eff[:, inner:]

    cdt = matmul_dtype
    xd = x.astype(cdt)
    weights = [
        _split_heads_w(wq_eff, heads, dim_head).astype(cdt),
        _split_heads_b(bq_eff, heads, dim_head).astype(jnp.float32),
        _split_heads_w(wk_eff, heads, dim_head).astype(cdt),
        _split_heads_b(bk_eff, heads, dim_head).astype(jnp.float32),
        _split_heads_w(wv_eff, heads, dim_head).astype(cdt),
        _split_heads_b(bv_eff, heads, dim_head).astype(jnp.float32),
        params['wout'].reshape(heads, dim_head, dim).astype(cdt),
        params['bout'].astype(jnp.float32),
    ]

    kernel = functools.partial(_fused_attention_kernel, heads=heads)

    # Advisory cost estimate for XLA's scheduler.
    flops = b * heads * (8 * N * dim * dim_head + 4 * N * N * dim_head)
    transcendentals = b * heads * (N * N + N)
    bytes_accessed = (xd.size * xd.dtype.itemsize
                      + sum(w.size * w.dtype.itemsize for w in weights)
                      + b * N * dim * 4)
    cost = pl.CostEstimate(flops=flops, transcendentals=transcendentals,
                           bytes_accessed=bytes_accessed)

    def _rep_spec(a):
        zeros = (0,) * a.ndim
        return pl.BlockSpec(a.shape, lambda i, z=zeros: z)

    out = pl.pallas_call(
        kernel,
        grid=(b,),
        in_specs=[pl.BlockSpec((1, N, dim), lambda i: (i, 0, 0))]
                 + [_rep_spec(w) for w in weights],
        out_specs=pl.BlockSpec((1, N, dim), lambda i: (i, 0, 0)),
        out_shape=jax.ShapeDtypeStruct((b, N, dim), jnp.float32),
        compiler_params=pltpu.CompilerParams(
            dimension_semantics=("parallel",)),      # v7x: shard batch over 2 TCs
        cost_estimate=cost,
    )(xd, *weights)

    # back to NCHW
    return jnp.transpose(out, (0, 2, 1)).reshape(b, dim, H, W)


# ---------------------------------------------------------------------------
# Pure-JAX reference (un-folded math, f32) for a sanity check
# ---------------------------------------------------------------------------
def reference(x_nchw, params, *, heads, dim_head):
    b, dim, H, W = x_nchw.shape
    N = H * W
    inner = heads * dim_head
    x = jnp.transpose(x_nchw.reshape(b, dim, N), (0, 2, 1))

    def bn(h, g, be, m, v):
        return (h - m) / jnp.sqrt(v + EPS) * g + be

    q = bn(x @ params['wq1'], params['gq'], params['bq'], params['mq'], params['vq']) @ params['wq2']
    kv = bn(x @ params['wkv1'], params['gkv'], params['bkv'], params['mkv'], params['vkv']) @ params['wkv2']
    k, v = kv[..., :inner], kv[..., inner:]

    def split(t):
        return jnp.transpose(t.reshape(b, N, heads, dim_head), (0, 2, 1, 3))

    qh, kh, vh = split(q), split(k), split(v)
    dots = jnp.einsum('bhid,bhjd->bhij', qh, kh) * dim_head ** -0.5
    attn = jax.nn.softmax(dots, axis=-1)
    oh = jnp.einsum('bhij,bhjd->bhid', attn, vh)
    o = jnp.transpose(oh, (0, 2, 1, 3)).reshape(b, N, inner)
    out = o @ params['wout'] + params['bout']
    return jnp.transpose(out, (0, 2, 1)).reshape(b, dim, H, W)


# ---------------------------------------------------------------------------
# Deterministic parameter construction (shapes implied by Attention.__init__)
# ---------------------------------------------------------------------------
def make_params(key, dim, heads, dim_head):
    inner = heads * dim_head
    ks = jax.random.split(key, 12)
    f32 = jnp.float32
    return {
        # to_q : Conv1x1(dim->dim, no bias) -> BN(dim) -> Conv1x1(dim->inner, no bias)
        'wq1':  0.1 * jax.random.normal(ks[0], (dim, dim), f32),
        'gq':   1.0 + 0.05 * jax.random.normal(ks[1], (1, dim), f32),
        'bq':   0.05 * jax.random.normal(ks[2], (1, dim), f32),
        'mq':   0.05 * jax.random.normal(ks[3], (1, dim), f32),
        'vq':   1.0 + 0.05 * jax.random.uniform(ks[4], (1, dim), f32),
        'wq2':  0.1 * jax.random.normal(ks[5], (dim, inner), f32),
        # to_kv: Conv1x1(dim->dim, no bias) -> BN(dim) -> Conv1x1(dim->2*inner, no bias)
        'wkv1': 0.1 * jax.random.normal(ks[6], (dim, dim), f32),
        'gkv':  1.0 + 0.05 * jax.random.normal(ks[7], (1, dim), f32),
        'bkv':  0.05 * jax.random.normal(ks[8], (1, dim), f32),
        'mkv':  0.05 * jax.random.normal(ks[9], (1, dim), f32),
        'vkv':  1.0 + 0.05 * jax.random.uniform(ks[10], (1, dim), f32),
        'wkv2': 0.1 * jax.random.normal(ks[11], (dim, 2 * inner), f32),
        # to_out: Conv1x1(inner->dim, bias) ; Dropout(p=0.0) is identity
        'wout': 0.1 * jax.random.normal(jax.random.fold_in(key, 100), (inner, dim), f32),
        'bout': 0.05 * jax.random.normal(jax.random.fold_in(key, 101), (1, dim), f32),
    }


if __name__ == "__main__":
    # small shapes: batch=2, dim=32, spatial 8x8 (N=64), heads=2, dim_head=16
    B, DIM, H, W = 2, 32, 8, 8
    HEADS, DIM_HEAD = 2, 16

    key = jax.random.PRNGKey(0)
    xkey, pkey = jax.random.split(key)
    x = jax.random.normal(xkey, (B, DIM, H, W), jnp.float32)   # NCHW, like PyTorch
    params = make_params(pkey, DIM, HEADS, DIM_HEAD)

    ref = reference(x, params, heads=HEADS, dim_head=DIM_HEAD)

    # f32 matmul-operand path: tight check against the un-folded reference
    out_f32 = attention_forward(x, params, heads=HEADS, dim_head=DIM_HEAD,
                                matmul_dtype=jnp.float32)
    out_f32 = jax.block_until_ready(out_f32)
    assert out_f32.shape == (B, DIM, H, W), out_f32.shape
    assert jnp.all(jnp.isfinite(out_f32))
    assert jnp.allclose(out_f32, ref, atol=5e-3, rtol=5e-3), \
        float(jnp.max(jnp.abs(out_f32 - ref)))

    # bf16 matmul-operand path (default; MXU-native on v6e/v7x): looser check
    out_bf16 = attention_forward(x, params, heads=HEADS, dim_head=DIM_HEAD,
                                 matmul_dtype=jnp.bfloat16)
    out_bf16 = jax.block_until_ready(out_bf16)
    assert out_bf16.shape == (B, DIM, H, W), out_bf16.shape
    assert jnp.all(jnp.isfinite(out_bf16))
    assert jnp.allclose(out_bf16, ref, atol=5e-2, rtol=5e-2), \
        float(jnp.max(jnp.abs(out_bf16 - ref)))

    print("KERNEL_OK")
</pallas_src>

<mosaic_0001>
module attributes {stable_mosaic.version = 11 : i64} {
  func.func @_fused_attention_kernel(%arg0: i32, %arg1: memref<1x64x32xf32, #tpu.memory_space<vmem>>, %arg2: memref<2x32x16xf32, #tpu.memory_space<vmem>>, %arg3: memref<2x1x16xf32, #tpu.memory_space<vmem>>, %arg4: memref<2x32x16xf32, #tpu.memory_space<vmem>>, %arg5: memref<2x1x16xf32, #tpu.memory_space<vmem>>, %arg6: memref<2x32x16xf32, #tpu.memory_space<vmem>>, %arg7: memref<2x1x16xf32, #tpu.memory_space<vmem>>, %arg8: memref<2x16x32xf32, #tpu.memory_space<vmem>>, %arg9: memref<1x32xf32, #tpu.memory_space<vmem>>, %arg10: memref<1x64x32xf32, #tpu.memory_space<vmem>>) attributes {dimension_semantics = [#tpu.dimension_semantics<parallel>], iteration_bounds = array<i64: 2>, scalar_prefetch = 0 : i64, scratch_operands = 0 : i64, tpu.core_type = #tpu.core_type<tc>, window_params = [{transform_indices = @transform_0, window_bounds = array<i64: 1, 64, 32>}, {pipeline_mode = #tpu.pipeline_mode<synchronous>, transform_indices = @transform_1, window_bounds = array<i64: 2, 32, 16>}, {pipeline_mode = #tpu.pipeline_mode<synchronous>, transform_indices = @transform_2, window_bounds = array<i64: 2, 1, 16>}, {pipeline_mode = #tpu.pipeline_mode<synchronous>, transform_indices = @transform_3, window_bounds = array<i64: 2, 32, 16>}, {pipeline_mode = #tpu.pipeline_mode<synchronous>, transform_indices = @transform_4, window_bounds = array<i64: 2, 1, 16>}, {pipeline_mode = #tpu.pipeline_mode<synchronous>, transform_indices = @transform_5, window_bounds = array<i64: 2, 32, 16>}, {pipeline_mode = #tpu.pipeline_mode<synchronous>, transform_indices = @transform_6, window_bounds = array<i64: 2, 1, 16>}, {pipeline_mode = #tpu.pipeline_mode<synchronous>, transform_indices = @transform_7, window_bounds = array<i64: 2, 16, 32>}, {pipeline_mode = #tpu.pipeline_mode<synchronous>, transform_indices = @transform_8, window_bounds = array<i64: 1, 32>}, {transform_indices = @transform_9, window_bounds = array<i64: 1, 64, 32>}]} {
    %c0 = arith.constant 0 : index
    %c0_0 = arith.constant 0 : index
    %c0_1 = arith.constant 0 : index
    %0 = vector.load %arg1[%c0, %c0_0, %c0_1] : memref<1x64x32xf32, #tpu.memory_space<vmem>>, vector<1x64x32xf32>
    %1 = vector.shape_cast %0 : vector<1x64x32xf32> to vector<64x32xf32>
    %c0_2 = arith.constant 0 : index
    %c0_3 = arith.constant 0 : index
    %2 = vector.load %arg9[%c0_2, %c0_3] : memref<1x32xf32, #tpu.memory_space<vmem>>, vector<1x32xf32>
    %c0_4 = arith.constant 0 : index
    %c0_5 = arith.constant 0 : index
    %c0_6 = arith.constant 0 : index
    %3 = vector.load %arg2[%c0_4, %c0_5, %c0_6] : memref<2x32x16xf32, #tpu.memory_space<vmem>>, vector<1x32x16xf32>
    %4 = vector.shape_cast %3 : vector<1x32x16xf32> to vector<32x16xf32>
    %cst = arith.constant dense<0.000000e+00> : vector<64x16xf32>
    %5 = tpu.matmul %1, %4, %cst {dimension_numbers = #tpu.dot_dimension_numbers<[1], [0], [0], [1], [0, 0, 1, 1], [], []>} : vector<64x32xf32>, vector<32x16xf32>, vector<64x16xf32> -> vector<64x16xf32>
    %c0_7 = arith.constant 0 : index
    %c0_8 = arith.constant 0 : index
    %c0_9 = arith.constant 0 : index
    %6 = vector.load %arg3[%c0_7, %c0_8, %c0_9] : memref<2x1x16xf32, #tpu.memory_space<vmem>>, vector<1x1x16xf32>
    %7 = vector.shape_cast %6 : vector<1x1x16xf32> to vector<1x16xf32>
    %8 = vector.broadcast %7 : vector<1x16xf32> to vector<64x16xf32>
    %9 = arith.addf %5, %8 : vector<64x16xf32>
    %c0_10 = arith.constant 0 : index
    %c0_11 = arith.constant 0 : index
    %c0_12 = arith.constant 0 : index
    %10 = vector.load %arg4[%c0_10, %c0_11, %c0_12] : memref<2x32x16xf32, #tpu.memory_space<vmem>>, vector<1x32x16xf32>
    %11 = vector.shape_cast %10 : vector<1x32x16xf32> to vector<32x16xf32>
    %cst_13 = arith.constant dense<0.000000e+00> : vector<64x16xf32>
    %12 = tpu.matmul %1, %11, %cst_13 {dimension_numbers = #tpu.dot_dimension_numbers<[1], [0], [0], [1], [0, 0, 1, 1], [], []>} : vector<64x32xf32>, vector<32x16xf32>, vector<64x16xf32> -> vector<64x16xf32>
    %c0_14 = arith.constant 0 : index
    %c0_15 = arith.constant 0 : index
    %c0_16 = arith.constant 0 : index
    %13 = vector.load %arg5[%c0_14, %c0_15, %c0_16] : memref<2x1x16xf32, #tpu.memory_space<vmem>>, vector<1x1x16xf32>
    %14 = vector.shape_cast %13 : vector<1x1x16xf32> to vector<1x16xf32>
    %15 = vector.broadcast %14 : vector<1x16xf32> to vector<64x16xf32>
    %16 = arith.addf %12, %15 : vector<64x16xf32>
    %c0_17 = arith.constant 0 : index
    %c0_18 = arith.constant 0 : index
    %c0_19 = arith.constant 0 : index
    %17 = vector.load %arg6[%c0_17, %c0_18, %c0_19] : memref<2x32x16xf32, #tpu.memory_space<vmem>>, vector<1x32x16xf32>
    %18 = vector.shape_cast %17 : vector<1x32x16xf32> to vector<32x16xf32>
    %cst_20 = arith.constant dense<0.000000e+00> : vector<64x16xf32>
    %19 = tpu.matmul %1, %18, %cst_20 {dimension_numbers = #tpu.dot_dimension_numbers<[1], [0], [0], [1], [0, 0, 1, 1], [], []>} : vector<64x32xf32>, vector<32x16xf32>, vector<64x16xf32> -> vector<64x16xf32>
    %c0_21 = arith.constant 0 : index
    %c0_22 = arith.constant 0 : index
    %c0_23 = arith.constant 0 : index
    %20 = vector.load %arg7[%c0_21, %c0_22, %c0_23] : memref<2x1x16xf32, #tpu.memory_space<vmem>>, vector<1x1x16xf32>
    %21 = vector.shape_cast %20 : vector<1x1x16xf32> to vector<1x16xf32>
    %22 = vector.broadcast %21 : vector<1x16xf32> to vector<64x16xf32>
    %23 = arith.addf %19, %22 : vector<64x16xf32>
    %cst_24 = arith.constant dense<0.000000e+00> : vector<64x64xf32>
    %24 = tpu.matmul %9, %16, %cst_24 {dimension_numbers = #tpu.dot_dimension_numbers<[1], [1], [0], [0], [0, 0, 1, 0], [], []>} : vector<64x16xf32>, vector<64x16xf32>, vector<64x64xf32> -> vector<64x64xf32>
    %cst_25 = arith.constant dense<0xFF800000> : vector<64xf32>
    %25 = vector.multi_reduction <maximumf>, %24, %cst_25 [1] : vector<64x64xf32> to vector<64xf32>
    %26 = vector.shape_cast %25 : vector<64xf32> to vector<64x1xf32>
    %27 = vector.broadcast %26 : vector<64x1xf32> to vector<64x64xf32>
    %28 = arith.subf %24, %27 : vector<64x64xf32>
    %29 = math.exp %28 : vector<64x64xf32>
    %cst_26 = arith.constant dense<0.000000e+00> : vector<64xf32>
    %30 = vector.multi_reduction <add>, %29, %cst_26 [1] : vector<64x64xf32> to vector<64xf32>
    %31 = vector.shape_cast %30 : vector<64xf32> to vector<64x1xf32>
    %32 = tpu.reciprocal %31 {approx = true} : vector<64x1xf32> -> vector<64x1xf32>
    %33 = vector.broadcast %32 : vector<64x1xf32> to vector<64x64xf32>
    %34 = arith.mulf %29, %33 : vector<64x64xf32>
    %cst_27 = arith.constant dense<0.000000e+00> : vector<64x16xf32>
    %35 = tpu.matmul %34, %23, %cst_27 {dimension_numbers = #tpu.dot_dimension_numbers<[1], [0], [0], [1], [0, 0, 1, 1], [], []>} : vector<64x64xf32>, vector<64x16xf32>, vector<64x16xf32> -> vector<64x16xf32>
    %c0_28 = arith.constant 0 : index
    %c0_29 = arith.constant 0 : index
    %c0_30 = arith.constant 0 : index
    %36 = vector.load %arg8[%c0_28, %c0_29, %c0_30] : memref<2x16x32xf32, #tpu.memory_space<vmem>>, vector<1x16x32xf32>
    %37 = vector.shape_cast %36 : vector<1x16x32xf32> to vector<16x32xf32>
    %cst_31 = arith.constant dense<0.000000e+00> : vector<64x32xf32>
    %38 = tpu.matmul %35, %37, %cst_31 {dimension_numbers = #tpu.dot_dimension_numbers<[1], [0], [0], [1], [0, 0, 1, 1], [], []>} : vector<64x16xf32>, vector<16x32xf32>, vector<64x32xf32> -> vector<64x32xf32>
    %39 = vector.broadcast %2 : vector<1x32xf32> to vector<64x32xf32>
    %40 = arith.addf %39, %38 : vector<64x32xf32>
    %c1 = arith.constant 1 : index
    %c0_32 = arith.constant 0 : index
    %c0_33 = arith.constant 0 : index
    %41 = vector.load %arg2[%c1, %c0_32, %c0_33] : memref<2x32x16xf32, #tpu.memory_space<vmem>>, vector<1x32x16xf32>
    %42 = vector.shape_cast %41 : vector<1x32x16xf32> to vector<32x16xf32>
    %cst_34 = arith.constant dense<0.000000e+00> : vector<64x16xf32>
    %43 = tpu.matmul %1, %42, %cst_34 {dimension_numbers = #tpu.dot_dimension_numbers<[1], [0], [0], [1], [0, 0, 1, 1], [], []>} : vector<64x32xf32>, vector<32x16xf32>, vector<64x16xf32> -> vector<64x16xf32>
    %c1_35 = arith.constant 1 : index
    %c0_36 = arith.constant 0 : index
    %c0_37 = arith.constant 0 : index
    %44 = vector.load %arg3[%c1_35, %c0_36, %c0_37] : memref<2x1x16xf32, #tpu.memory_space<vmem>>, vector<1x1x16xf32>
    %45 = vector.shape_cast %44 : vector<1x1x16xf32> to vector<1x16xf32>
    %46 = vector.broadcast %45 : vector<1x16xf32> to vector<64x16xf32>
    %47 = arith.addf %43, %46 : vector<64x16xf32>
    %c1_38 = arith.constant 1 : index
    %c0_39 = arith.constant 0 : index
    %c0_40 = arith.constant 0 : index
    %48 = vector.load %arg4[%c1_38, %c0_39, %c0_40] : memref<2x32x16xf32, #tpu.memory_space<vmem>>, vector<1x32x16xf32>
    %49 = vector.shape_cast %48 : vector<1x32x16xf32> to vector<32x16xf32>
    %cst_41 = arith.constant dense<0.000000e+00> : vector<64x16xf32>
    %50 = tpu.matmul %1, %49, %cst_41 {dimension_numbers = #tpu.dot_dimension_numbers<[1], [0], [0], [1], [0, 0, 1, 1], [], []>} : vector<64x32xf32>, vector<32x16xf32>, vector<64x16xf32> -> vector<64x16xf32>
    %c1_42 = arith.constant 1 : index
    %c0_43 = arith.constant 0 : index
    %c0_44 = arith.constant 0 : index
    %51 = vector.load %arg5[%c1_42, %c0_43, %c0_44] : memref<2x1x16xf32, #tpu.memory_space<vmem>>, vector<1x1x16xf32>
    %52 = vector.shape_cast %51 : vector<1x1x16xf32> to vector<1x16xf32>
    %53 = vector.broadcast %52 : vector<1x16xf32> to vector<64x16xf32>
    %54 = arith.addf %50, %53 : vector<64x16xf32>
    %c1_45 = arith.constant 1 : index
    %c0_46 = arith.constant 0 : index
    %c0_47 = arith.constant 0 : index
    %55 = vector.load %arg6[%c1_45, %c0_46, %c0_47] : memref<2x32x16xf32, #tpu.memory_space<vmem>>, vector<1x32x16xf32>
    %56 = vector.shape_cast %55 : vector<1x32x16xf32> to vector<32x16xf32>
    %cst_48 = arith.constant dense<0.000000e+00> : vector<64x16xf32>
    %57 = tpu.matmul %1, %56, %cst_48 {dimension_numbers = #tpu.dot_dimension_numbers<[1], [0], [0], [1], [0, 0, 1, 1], [], []>} : vector<64x32xf32>, vector<32x16xf32>, vector<64x16xf32> -> vector<64x16xf32>
    %c1_49 = arith.constant 1 : index
    %c0_50 = arith.constant 0 : index
    %c0_51 = arith.constant 0 : index
    %58 = vector.load %arg7[%c1_49, %c0_50, %c0_51] : memref<2x1x16xf32, #tpu.memory_space<vmem>>, vector<1x1x16xf32>
    %59 = vector.shape_cast %58 : vector<1x1x16xf32> to vector<1x16xf32>
    %60 = vector.broadcast %59 : vector<1x16xf32> to vector<64x16xf32>
    %61 = arith.addf %57, %60 : vector<64x16xf32>
    %cst_52 = arith.constant dense<0.000000e+00> : vector<64x64xf32>
    %62 = tpu.matmul %47, %54, %cst_52 {dimension_numbers = #tpu.dot_dimension_numbers<[1], [1], [0], [0], [0, 0, 1, 0], [], []>} : vector<64x16xf32>, vector<64x16xf32>, vector<64x64xf32> -> vector<64x64xf32>
    %cst_53 = arith.constant dense<0xFF800000> : vector<64xf32>
    %63 = vector.multi_reduction <maximumf>, %62, %cst_53 [1] : vector<64x64xf32> to vector<64xf32>
    %64 = vector.shape_cast %63 : vector<64xf32> to vector<64x1xf32>
    %65 = vector.broadcast %64 : vector<64x1xf32> to vector<64x64xf32>
    %66 = arith.subf %62, %65 : vector<64x64xf32>
    %67 = math.exp %66 : vector<64x64xf32>
    %cst_54 = arith.constant dense<0.000000e+00> : vector<64xf32>
    %68 = vector.multi_reduction <add>, %67, %cst_54 [1] : vector<64x64xf32> to vector<64xf32>
    %69 = vector.shape_cast %68 : vector<64xf32> to vector<64x1xf32>
    %70 = tpu.reciprocal %69 {approx = true} : vector<64x1xf32> -> vector<64x1xf32>
    %71 = vector.broadcast %70 : vector<64x1xf32> to vector<64x64xf32>
    %72 = arith.mulf %67, %71 : vector<64x64xf32>
    %cst_55 = arith.constant dense<0.000000e+00> : vector<64x16xf32>
    %73 = tpu.matmul %72, %61, %cst_55 {dimension_numbers = #tpu.dot_dimension_numbers<[1], [0], [0], [1], [0, 0, 1, 1], [], []>} : vector<64x64xf32>, vector<64x16xf32>, vector<64x16xf32> -> vector<64x16xf32>
    %c1_56 = arith.constant 1 : index
    %c0_57 = arith.constant 0 : index
    %c0_58 = arith.constant 0 : index
    %74 = vector.load %arg8[%c1_56, %c0_57, %c0_58] : memref<2x16x32xf32, #tpu.memory_space<vmem>>, vector<1x16x32xf32>
    %75 = vector.shape_cast %74 : vector<1x16x32xf32> to vector<16x32xf32>
    %cst_59 = arith.constant dense<0.000000e+00> : vector<64x32xf32>
    %76 = tpu.matmul %73, %75, %cst_59 {dimension_numbers = #tpu.dot_dimension_numbers<[1], [0], [0], [1], [0, 0, 1, 1], [], []>} : vector<64x16xf32>, vector<16x32xf32>, vector<64x32xf32> -> vector<64x32xf32>
    %77 = arith.addf %40, %76 : vector<64x32xf32>
    %c0_60 = arith.constant 0 : index
    %c0_61 = arith.constant 0 : index
    %c0_62 = arith.constant 0 : index
    %78 = vector.load %arg10[%c0_60, %c0_61, %c0_62] : memref<1x64x32xf32, #tpu.memory_space<vmem>>, vector<1x64x32xf32>
    %79 = vector.shape_cast %78 : vector<1x64x32xf32> to vector<64x32xf32>
    %80 = vector.shape_cast %77 : vector<64x32xf32> to vector<1x64x32xf32>
    tpu.vector_store %arg10[%c0_60, %c0_61, %c0_62], %80 {strides = array<i32>} : memref<1x64x32xf32, #tpu.memory_space<vmem>>, vector<1x64x32xf32>,
    return
  }
  func.func @transform_0(%arg0: i32) -> (i32, i32, i32) {
    %c0_i32 = arith.constant 0 : i32
    %c0_i32_0 = arith.constant 0 : i32
    %c0_i32_1 = arith.constant 0 : i32
    return %arg0, %c0_i32, %c0_i32_0 : i32, i32, i32
  }
  func.func @transform_1(%arg0: i32) -> (i32, i32, i32) {
    %c0_i32 = arith.constant 0 : i32
    %c0_i32_0 = arith.constant 0 : i32
    %c0_i32_1 = arith.constant 0 : i32
    %c0_i32_2 = arith.constant 0 : i32
    return %c0_i32, %c0_i32_0, %c0_i32_1 : i32, i32, i32
  }
  func.func @transform_2(%arg0: i32) -> (i32, i32, i32) {
    %c0_i32 = arith.constant 0 : i32
    %c0_i32_0 = arith.constant 0 : i32
    %c0_i32_1 = arith.constant 0 : i32
    %c0_i32_2 = arith.constant 0 : i32
    return %c0_i32, %c0_i32_0, %c0_i32_1 : i32, i32, i32
  }
  func.func @transform_3(%arg0: i32) -> (i32, i32, i32) {
    %c0_i32 = arith.constant 0 : i32
    %c0_i32_0 = arith.constant 0 : i32
    %c0_i32_1 = arith.constant 0 : i32
    %c0_i32_2 = arith.constant 0 : i32
    return %c0_i32, %c0_i32_0, %c0_i32_1 : i32, i32, i32
  }
  func.func @transform_4(%arg0: i32) -> (i32, i32, i32) {
    %c0_i32 = arith.constant 0 : i32
    %c0_i32_0 = arith.constant 0 : i32
    %c0_i32_1 = arith.constant 0 : i32
    %c0_i32_2 = arith.constant 0 : i32
    return %c0_i32, %c0_i32_0, %c0_i32_1 : i32, i32, i32
  }
  func.func @transform_5(%arg0: i32) -> (i32, i32, i32) {
    %c0_i32 = arith.constant 0 : i32
    %c0_i32_0 = arith.constant 0 : i32
    %c0_i32_1 = arith.constant 0 : i32
    %c0_i32_2 = arith.constant 0 : i32
    return %c0_i32, %c0_i32_0, %c0_i32_1 : i32, i32, i32
  }
  func.func @transform_6(%arg0: i32) -> (i32, i32, i32) {
    %c0_i32 = arith.constant 0 : i32
    %c0_i32_0 = arith.constant 0 : i32
    %c0_i32_1 = arith.constant 0 : i32
    %c0_i32_2 = arith.constant 0 : i32
    return %c0_i32, %c0_i32_0, %c0_i32_1 : i32, i32, i32
  }
  func.func @transform_7(%arg0: i32) -> (i32, i32, i32) {
    %c0_i32 = arith.constant 0 : i32
    %c0_i32_0 = arith.constant 0 : i32
    %c0_i32_1 = arith.constant 0 : i32
    %c0_i32_2 = arith.constant 0 : i32
    return %c0_i32, %c0_i32_0, %c0_i32_1 : i32, i32, i32
  }
  func.func @transform_8(%arg0: i32) -> (i32, i32) {
    %c0_i32 = arith.constant 0 : i32
    %c0_i32_0 = arith.constant 0 : i32
    %c0_i32_1 = arith.constant 0 : i32
    return %c0_i32, %c0_i32_0 : i32, i32
  }
  func.func @transform_9(%arg0: i32) -> (i32, i32, i32) {
    %c0_i32 = arith.constant 0 : i32
    %c0_i32_0 = arith.constant 0 : i32
    %c0_i32_1 = arith.constant 0 : i32
    return %arg0, %c0_i32, %c0_i32_0 : i32, i32, i32
  }
}

</mosaic_0001>

<llo_original>
// kernel: tpu_custom_call.1
$region0: #{tpu_custom_call.1}
  #allocation0 [shape = 'u32[]', space=smem, size = 0x4, offset = 0x4, fixed_abs, tag = 'smem constant byte address 0x4 - core index']
  #allocation1 [shape = 'u32[144,128]{1,0:T(1,128)}', space=vmem, size = 0x12000, scoped, tag = 'internal scratch']
  %s0 = inlined_call_operand.vmem [shape: f32[2,64,32], index: 0, kind: input, shape index: {}]
  %s1 = inlined_call_operand.vmem [shape: f32[2,32,16], index: 1, kind: input, shape index: {}]
  %s2 = inlined_call_operand.vmem [shape: f32[2,1,16], index: 2, kind: input, shape index: {}]
  %s3 = inlined_call_operand.vmem [shape: f32[2,32,16], index: 3, kind: input, shape index: {}]
  %s4 = inlined_call_operand.vmem [shape: f32[2,1,16], index: 4, kind: input, shape index: {}]
  %s5 = inlined_call_operand.vmem [shape: f32[2,32,16], index: 5, kind: input, shape index: {}]
  %s6 = inlined_call_operand.vmem [shape: f32[2,1,16], index: 6, kind: input, shape index: {}]
  %s7 = inlined_call_operand.vmem [shape: f32[2,16,32], index: 7, kind: input, shape index: {}]
  %s8 = inlined_call_operand.vmem [shape: f32[1,32], index: 8, kind: input, shape index: {}]
  %s9 = inlined_call_operand.vmem [shape: f32[2,64,32], index: 9, kind: output, shape index: {}]
  %s10 = sld [smem:[#allocation0]]
  $region69: #{tpu_custom_call.1} parent=0
    _
  %s12 = ssub.s32 1, %s10
  %s13 = scalar_select 0, %s12, %s10
  loop: start=0, step=1, limit=4
  $region2: #{tpu_custom_call.1} parent=0 // loop_pre_header
    _
  $region3: #{tpu_custom_call.1} parent=0 // loop_header
    %s15 = sphi 0, %s19
    %p16 = scmp.ge.s32.totalorder %s15, 4
    %s25 = sphi 0, %s27
    %s28 = sphi 0, %s25
    %s29 = sphi 0, %s28
    %s45 = sphi 0, %s29
    %s49 = sphi 0, %s49
    %s51 = sphi 0, %s49
    %s52 = sphi 0, %s51
    %s66 = sphi 0, %s52
    %s70 = sphi 0, %s70
    %s72 = sphi 0, %s70
    %s73 = sphi 0, %s72
    %s87 = sphi 0, %s73
    %s91 = sphi 0, %s91
    %s93 = sphi 0, %s91
    %s94 = sphi 0, %s93
    %s108 = sphi 0, %s94
    %s112 = sphi 0, %s112
    %s114 = sphi 0, %s112
    %s115 = sphi 0, %s114
    %s129 = sphi 0, %s115
    %s133 = sphi 0, %s133
    %s135 = sphi 0, %s133
    %s136 = sphi 0, %s135
    %s150 = sphi 0, %s136
    %s154 = sphi 0, %s154
    %s156 = sphi 0, %s154
    %s157 = sphi 0, %s156
    %s171 = sphi 0, %s157
    %s175 = sphi 0, %s175
    %s177 = sphi 0, %s175
    %s178 = sphi 0, %s177
    %s192 = sphi 0, %s178
    %s196 = sphi 0, %s196
    %s198 = sphi 0, %s196
    %s199 = sphi 0, %s198
    %s213 = sphi 0, %s199
    %s219 = sphi 0, %s221
    %s222 = sphi 0, %s219
    %s223 = sphi 0, %s222
    %s239 = sphi 0, %s223
  $region4: #{tpu_custom_call.1} parent=0 // loop_header_branch
    %18 = sbr.rel (%p16) target = $region8
  $region5: #{tpu_custom_call.1} parent=0 // loop_body
    %s20 = ssub.s32 %s15, 1
    %s21 = ssub.s32 %s15, 2
    %s22 = sadd.s32 %s15, 1
    %s23 = ssub.s32 %s15, %s22
    %p24 = scmp.eq.s32.totalorder %s23, 0
    %s26 = sadd.s32 %s25, 1
    %s27 = scalar_select %p24, %s25, %s26
    %p30 = pneg %p24
    %p31 = scmp.eq.s32.totalorder %s15, 1
    %p32 = por %p30, %p31
    %p33 = scmp.ne.s32.totalorder %s25, %s28
    %p34 = scmp.eq.s32.totalorder %s15, 0
    %p35 = por %p33, %p34
    %p36 = scmp.ne.s32.totalorder %s25, %s28
    %p37 = scmp.eq.s32.totalorder %s20, 1
    %p38 = por %p36, %p37
    %p39 = scmp.ne.s32.totalorder %s28, %s29
    %p40 = scmp.eq.s32.totalorder %s20, 0
    %p41 = por %p39, %p40
    %p42 = scmp.ne.s32.totalorder %s28, %s29
    %p43 = scmp.eq.s32.totalorder %s21, 1
    %p44 = por %p42, %p43
    %p46 = scmp.ne.s32.totalorder %s29, %s45
    %p47 = scmp.eq.s32.totalorder %s21, 0
    %p48 = por %p46, %p47
    %s50 = sadd.s32 %s49, 1
    %p53 = scmp.eq.s32.totalorder %s15, 1
    %p54 = scmp.ne.s32.totalorder %s49, %s51
    %p55 = scmp.eq.s32.totalorder %s15, 0
    %p56 = por %p54, %p55
    %p57 = scmp.ne.s32.totalorder %s49, %s51
    %p58 = scmp.eq.s32.totalorder %s20, 1
    %p59 = por %p57, %p58
    %p60 = scmp.ne.s32.totalorder %s51, %s52
    %p61 = scmp.eq.s32.totalorder %s20, 0
    %p62 = por %p60, %p61
    %p63 = scmp.ne.s32.totalorder %s51, %s52
    %p64 = scmp.eq.s32.totalorder %s21, 1
    %p65 = por %p63, %p64
    %p67 = scmp.ne.s32.totalorder %s52, %s66
    %p68 = scmp.eq.s32.totalorder %s21, 0
    %p69 = por %p67, %p68
    %s71 = sadd.s32 %s70, 1
    %p74 = scmp.eq.s32.totalorder %s15, 1
    %p75 = scmp.ne.s32.totalorder %s70, %s72
    %p76 = scmp.eq.s32.totalorder %s15, 0
    %p77 = por %p75, %p76
    %p78 = scmp.ne.s32.totalorder %s70, %s72
    %p79 = scmp.eq.s32.totalorder %s20, 1
    %p80 = por %p78, %p79
    %p81 = scmp.ne.s32.totalorder %s72, %s73
    %p82 = scmp.eq.s32.totalorder %s20, 0
    %p83 = por %p81, %p82
    %p84 = scmp.ne.s32.totalorder %s72, %s73
    %p85 = scmp.eq.s32.totalorder %s21, 1
    %p86 = por %p84, %p85
    %p88 = scmp.ne.s32.totalorder %s73, %s87
    %p89 = scmp.eq.s32.totalorder %s21, 0
    %p90 = por %p88, %p89
    %s92 = sadd.s32 %s91, 1
    %p95 = scmp.eq.s32.totalorder %s15, 1
    %p96 = scmp.ne.s32.totalorder %s91, %s93
    %p97 = scmp.eq.s32.totalorder %s15, 0
    %p98 = por %p96, %p97
    %p99 = scmp.ne.s32.totalorder %s91, %s93
    %p100 = scmp.eq.s32.totalorder %s20, 1
    %p101 = por %p99, %p100
    %p102 = scmp.ne.s32.totalorder %s93, %s94
    %p103 = scmp.eq.s32.totalorder %s20, 0
    %p104 = por %p102, %p103
    %p105 = scmp.ne.s32.totalorder %s93, %s94
    %p106 = scmp.eq.s32.totalorder %s21, 1
    %p107 = por %p105, %p106
    %p109 = scmp.ne.s32.totalorder %s94, %s108
    %p110 = scmp.eq.s32.totalorder %s21, 0
    %p111 = por %p109, %p110
    %s113 = sadd.s32 %s112, 1
    %p116 = scmp.eq.s32.totalorder %s15, 1
    %p117 = scmp.ne.s32.totalorder %s112, %s114
    %p118 = scmp.eq.s32.totalorder %s15, 0
    %p119 = por %p117, %p118
    %p120 = scmp.ne.s32.totalorder %s112, %s114
    %p121 = scmp.eq.s32.totalorder %s20, 1
    %p122 = por %p120, %p121
    %p123 = scmp.ne.s32.totalorder %s114, %s115
    %p124 = scmp.eq.s32.totalorder %s20, 0
    %p125 = por %p123, %p124
    %p126 = scmp.ne.s32.totalorder %s114, %s115
    %p127 = scmp.eq.s32.totalorder %s21, 1
    %p128 = por %p126, %p127
    %p130 = scmp.ne.s32.totalorder %s115, %s129
    %p131 = scmp.eq.s32.totalorder %s21, 0
    %p132 = por %p130, %p131
    %s134 = sadd.s32 %s133, 1
    %p137 = scmp.eq.s32.totalorder %s15, 1
    %p138 = scmp.ne.s32.totalorder %s133, %s135
    %p139 = scmp.eq.s32.totalorder %s15, 0
    %p140 = por %p138, %p139
    %p141 = scmp.ne.s32.totalorder %s133, %s135
    %p142 = scmp.eq.s32.totalorder %s20, 1
    %p143 = por %p141, %p142
    %p144 = scmp.ne.s32.totalorder %s135, %s136
    %p145 = scmp.eq.s32.totalorder %s20, 0
    %p146 = por %p144, %p145
    %p147 = scmp.ne.s32.totalorder %s135, %s136
    %p148 = scmp.eq.s32.totalorder %s21, 1
    %p149 = por %p147, %p148
    %p151 = scmp.ne.s32.totalorder %s136, %s150
    %p152 = scmp.eq.s32.totalorder %s21, 0
    %p153 = por %p151, %p152
    %s155 = sadd.s32 %s154, 1
    %p158 = scmp.eq.s32.totalorder %s15, 1
    %p159 = scmp.ne.s32.totalorder %s154, %s156
    %p160 = scmp.eq.s32.totalorder %s15, 0
    %p161 = por %p159, %p160
    %p162 = scmp.ne.s32.totalorder %s154, %s156
    %p163 = scmp.eq.s32.totalorder %s20, 1
    %p164 = por %p162, %p163
    %p165 = scmp.ne.s32.totalorder %s156, %s157
    %p166 = scmp.eq.s32.totalorder %s20, 0
    %p167 = por %p165, %p166
    %p168 = scmp.ne.s32.totalorder %s156, %s157
    %p169 = scmp.eq.s32.totalorder %s21, 1
    %p170 = por %p168, %p169
    %p172 = scmp.ne.s32.totalorder %s157, %s171
    %p173 = scmp.eq.s32.totalorder %s21, 0
    %p174 = por %p172, %p173
    %s176 = sadd.s32 %s175, 1
    %p179 = scmp.eq.s32.totalorder %s15, 1
    %p180 = scmp.ne.s32.totalorder %s175, %s177
    %p181 = scmp.eq.s32.totalorder %s15, 0
    %p182 = por %p180, %p181
    %p183 = scmp.ne.s32.totalorder %s175, %s177
    %p184 = scmp.eq.s32.totalorder %s20, 1
    %p185 = por %p183, %p184
    %p186 = scmp.ne.s32.totalorder %s177, %s178
    %p187 = scmp.eq.s32.totalorder %s20, 0
    %p188 = por %p186, %p187
    %p189 = scmp.ne.s32.totalorder %s177, %s178
    %p190 = scmp.eq.s32.totalorder %s21, 1
    %p191 = por %p189, %p190
    %p193 = scmp.ne.s32.totalorder %s178, %s192
    %p194 = scmp.eq.s32.totalorder %s21, 0
    %p195 = por %p193, %p194
    %s197 = sadd.s32 %s196, 1
    %p200 = scmp.eq.s32.totalorder %s15, 1
    %p201 = scmp.ne.s32.totalorder %s196, %s198
    %p202 = scmp.eq.s32.totalorder %s15, 0
    %p203 = por %p201, %p202
    %p204 = scmp.ne.s32.totalorder %s196, %s198
    %p205 = scmp.eq.s32.totalorder %s20, 1
    %p206 = por %p204, %p205
    %p207 = scmp.ne.s32.totalorder %s198, %s199
    %p208 = scmp.eq.s32.totalorder %s20, 0
    %p209 = por %p207, %p208
    %p210 = scmp.ne.s32.totalorder %s198, %s199
    %p211 = scmp.eq.s32.totalorder %s21, 1
    %p212 = por %p210, %p211
    %p214 = scmp.ne.s32.totalorder %s199, %s213
    %p215 = scmp.eq.s32.totalorder %s21, 0
    %p216 = por %p214, %p215
    %s217 = ssub.s32 %s15, %s22
    %p218 = scmp.eq.s32.totalorder %s217, 0
    %s220 = sadd.s32 %s219, 1
    %s221 = scalar_select %p218, %s219, %s220
    %p224 = pneg %p218
    %p225 = scmp.eq.s32.totalorder %s15, 1
    %p226 = por %p224, %p225
    %p227 = scmp.ne.s32.totalorder %s219, %s222
    %p228 = scmp.eq.s32.totalorder %s15, 0
    %p229 = por %p227, %p228
    %p230 = scmp.ne.s32.totalorder %s219, %s222
    %p231 = scmp.eq.s32.totalorder %s20, 1
    %p232 = por %p230, %p231
    %p233 = scmp.ne.s32.totalorder %s222, %s223
    %p234 = scmp.eq.s32.totalorder %s20, 0
    %p235 = por %p233, %p234
    %p236 = scmp.ne.s32.totalorder %s222, %s223
    %p237 = scmp.eq.s32.totalorder %s21, 1
    %p238 = por %p236, %p237
    %p240 = scmp.ne.s32.totalorder %s223, %s239
    %p241 = scmp.eq.s32.totalorder %s21, 0
    %p242 = por %p240, %p241
    %p243 = scmp.le.s32.totalorder 1, %s15
    %p244 = scmp.lt.s32.totalorder %s15, 3
    %p245 = pnand %p243, %p244
    %p246 = pneg %p245
    // Predicated region
    $region9: #{tpu_custom_call.1} parent=5 // pred_check
      _
    $region10: #{tpu_custom_call.1} parent=5 // pred_check_branch
      %248 = sbr.rel (%p245) target = $region12
    $region11: #{tpu_custom_call.1} parent=5 // pred_region
      %s249 = ssub.s32 %s15, 1
      // Predicated region
      $region13: #{tpu_custom_call.1} parent=11 // pred_check
        %p250 = pneg %p62
      $region14: #{tpu_custom_call.1} parent=11 // pred_check_branch
        %252 = sbr.rel (%p250) target = $region16
      $region15: #{tpu_custom_call.1} parent=11 // pred_region
        _
      $region16: #{tpu_custom_call.1} parent=11 // pred_fallthru
        _
      // Predicated region
      $region17: #{tpu_custom_call.1} parent=11 // pred_check
        %p253 = pneg %p83
      $region18: #{tpu_custom_call.1} parent=11 // pred_check_branch
        %255 = sbr.rel (%p253) target = $region20
      $region19: #{tpu_custom_call.1} parent=11 // pred_region
        _
      $region20: #{tpu_custom_call.1} parent=11 // pred_fallthru
        _
      // Predicated region
      $region21: #{tpu_custom_call.1} parent=11 // pred_check
        %p256 = pneg %p104
      $region22: #{tpu_custom_call.1} parent=11 // pred_check_branch
        %258 = sbr.rel (%p256) target = $region24
      $region23: #{tpu_custom_call.1} parent=11 // pred_region
        _
      $region24: #{tpu_custom_call.1} parent=11 // pred_fallthru
        _
      // Predicated region
      $region25: #{tpu_custom_call.1} parent=11 // pred_check
        %p259 = pneg %p125
      $region26: #{tpu_custom_call.1} parent=11 // pred_check_branch
        %261 = sbr.rel (%p259) target = $region28
      $region27: #{tpu_custom_call.1} parent=11 // pred_region
        _
      $region28: #{tpu_custom_call.1} parent=11 // pred_fallthru
        _
      // Predicated region
      $region29: #{tpu_custom_call.1} parent=11 // pred_check
        %p262 = pneg %p146
      $region30: #{tpu_custom_call.1} parent=11 // pred_check_branch
        %264 = sbr.rel (%p262) target = $region32
      $region31: #{tpu_custom_call.1} parent=11 // pred_region
        _
      $region32: #{tpu_custom_call.1} parent=11 // pred_fallthru
        _
      // Predicated region
      $region33: #{tpu_custom_call.1} parent=11 // pred_check
        %p265 = pneg %p167
      $region34: #{tpu_custom_call.1} parent=11 // pred_check_branch
        %267 = sbr.rel (%p265) target = $region36
      $region35: #{tpu_custom_call.1} parent=11 // pred_region
        _
      $region36: #{tpu_custom_call.1} parent=11 // pred_fallthru
        _
      // Predicated region
      $region37: #{tpu_custom_call.1} parent=11 // pred_check
        %p268 = pneg %p188
      $region38: #{tpu_custom_call.1} parent=11 // pred_check_branch
        %270 = sbr.rel (%p268) target = $region40
      $region39: #{tpu_custom_call.1} parent=11 // pred_region
        _
      $region40: #{tpu_custom_call.1} parent=11 // pred_fallthru
        _
      // Predicated region
      $region41: #{tpu_custom_call.1} parent=11 // pred_check
        %p271 = pneg %p209
      $region42: #{tpu_custom_call.1} parent=11 // pred_check_branch
        %273 = sbr.rel (%p271) target = $region44
      $region43: #{tpu_custom_call.1} parent=11 // pred_region
        _
      $region44: #{tpu_custom_call.1} parent=11 // pred_fallthru
        _
    $region12: #{tpu_custom_call.1} parent=5 // pred_fallthru
      _
    %p274 = scmp.lt.s32.totalorder %s15, 2
    // Predicated region
    $region45: #{tpu_custom_call.1} parent=5 // pred_check
      %p275 = pneg %p274
    $region46: #{tpu_custom_call.1} parent=5 // pred_check_branch
      %277 = sbr.rel (%p275) target = $region48
    $region47: #{tpu_custom_call.1} parent=5 // pred_region
      // Predicated region
      $region49: #{tpu_custom_call.1} parent=47 // pred_check
        %p278 = pneg %p35
      $region50: #{tpu_custom_call.1} parent=47 // pred_check_branch
        %280 = sbr.rel (%p278) target = $region52
      $region51: #{tpu_custom_call.1} parent=47 // pred_region
        %p281 = scmp.lt.s32.totalorder %s15, 1
        %s282 = scalar_select %p281, %s15, 1
        %s283 = smul.addr %s282, 8
        %s284 = smul.addr %s283, 8
        %s285 = scalar_lea.vmem %s0, %s284
      $region52: #{tpu_custom_call.1} parent=47 // pred_fallthru
        _
    $region48: #{tpu_custom_call.1} parent=5 // pred_fallthru
      _
    %p286 = scmp.le.s32.totalorder 1, %s15
    %p287 = scmp.lt.s32.totalorder %s15, 3
    %p288 = pnand %p286, %p287
    %p289 = pneg %p288
    // Predicated region
    $region53: #{tpu_custom_call.1} parent=5 // pred_check
      _
    $region54: #{tpu_custom_call.1} parent=5 // pred_check_branch
      %291 = sbr.rel (%p288) target = $region56
    $region55: #{tpu_custom_call.1} parent=5 // pred_region
      %s292 = ssub.s32 %s15, 1
      %p293 = scmp.lt.s32.totalorder %s20, 1
      %s294 = scalar_select %p293, %s20, 1
      %s295 = smul.addr %s294, 8
      %s296 = smul.addr %s295, 8
      %s297 = scalar_lea.vmem %s0, %s296
      %p298 = pneg %p41
      %p299 = pneg %p38
      %p300 = pneg %p62
      %p301 = pneg %p59
      %p302 = pneg %p83
      %p303 = pneg %p80
      %p304 = pneg %p104
      %p305 = pneg %p101
      %p306 = pneg %p125
      %p307 = pneg %p122
      %p308 = pneg %p146
      %p309 = pneg %p143
      %p310 = pneg %p167
      %p311 = pneg %p164
      %p312 = pneg %p188
      %p313 = pneg %p185
      %p314 = pneg %p209
      %p315 = pneg %p206
      %p316 = pneg %p235
      %p317 = pneg %p232
      %p318 = scmp.lt.s32.totalorder %s20, 1
      %s319 = scalar_select %p318, %s20, 1
      %s320 = smul.addr %s319, 8
      %s321 = smul.addr %s320, 8
      %s322 = scalar_lea.vmem %s9, %s321
      %p323 = scmp.lt.s32.totalorder %s20, 1
      %s324 = scalar_select %p323, %s20, 1
      %s325 = smul.addr %s324, 8
      %s326 = smul.addr %s325, 8
      %s327 = scalar_lea.vmem %s0, %s326
      %p328 = scmp.lt.s32.totalorder %s20, 1
      %s329 = scalar_select %p328, %s20, 1
      %s330 = smul.addr %s329, 8
      %s331 = smul.addr %s330, 8
      %s332 = scalar_lea.vmem %s9, %s331
      %v333 = vld [vmem:[%s327] sm:$0xff]
      %v334 = vld [vmem:[%s327 + $0x8] sm:$0xff]
      %v335 = vld [vmem:[%s327 + $0x10] sm:$0xff]
      %v336 = vld [vmem:[%s327 + $0x18] sm:$0xff]
      %v337 = vld [vmem:[%s327 + $0x20] sm:$0xff]
      %v338 = vld [vmem:[%s327 + $0x28] sm:$0xff]
      %v339 = vld [vmem:[%s327 + $0x30] sm:$0xff]
      %v340 = vld [vmem:[%s327 + $0x38] sm:$0xff]
      %v341 = vld [vmem:[%s8] sm:$0x1]
      %v342 = vld [vmem:[%s1] sm:$0xff]
      %v343 = vld [vmem:[%s1 + $0x8] sm:$0xff]
      %v344 = vld [vmem:[%s1 + $0x10] sm:$0xff]
      %v345 = vld [vmem:[%s1 + $0x18] sm:$0xff]
      %v346 = vld [vmem:[%s2] sm:$0x1]
      %v348 = vlaneseq
      %v349 = vshrl.u32 %v348, 7
      %v350 = vsub.s32 0, %v349
      %v351 = vrot.slane %v346, %v350
      %vm353 = vcmask 261120
      %v355 = vsel %vm353, %v333, 0
      %v358 = vsel %vm353, %v334, 0
      %v361 = vsel %vm353, %v335, 0
      %v364 = vsel %vm353, %v336, 0
      %v367 = vsel %vm353, %v337, 0
      %v370 = vsel %vm353, %v338, 0
      %v373 = vsel %vm353, %v339, 0
      %v376 = vsel %vm353, %v340, 0
      %378 = vmatprep.subr.mxu0 0.0
      %379 = vmatpush1.msra.mxu0 %v342
      %380 = vmatprep.subr.mxu0 0.0
      %381 = vmatpush1.msra.mxu0 %v343
      %382 = vmatprep.subr.mxu0 0.0
      %383 = vmatpush1.msra.mxu0 %v344
      %384 = vmatprep.subr.mxu0 0.0
      %385 = vmatpush1.msra.mxu0 %v345
      %386 = vmatprep.subr.mxu0 0.0
      %387 = vmatpush1.msra.mxu0 0.0
      %388 = vmatprep.subr.mxu0 0.0
      %389 = vmatpush1.msra.mxu0 0.0
      %390 = vmatprep.subr.mxu0 0.0
      %391 = vmatpush1.msra.mxu0 0.0
      %392 = vmatprep.subr.mxu0 0.0
      %393 = vmatpush1.msra.mxu0 0.0
      %394 = vmatprep.subr.mxu0 0.0
      %395 = vmatpush1.msra.mxu0 0.0
      %396 = vmatprep.subr.mxu0 0.0
      %397 = vmatpush1.msra.mxu0 0.0
      %398 = vmatprep.subr.mxu0 0.0
      %399 = vmatpush1.msra.mxu0 0.0
      %400 = vmatprep.subr.mxu0 0.0
      %401 = vmatpush1.msra.mxu0 0.0
      %402 = vmatprep.subr.mxu0 0.0
      %403 = vmatpush1.msra.mxu0 0.0
      %404 = vmatprep.subr.mxu0 0.0
      %405 = vmatpush1.msra.mxu0 0.0
      %406 = vmatprep.subr.mxu0 0.0
      %407 = vmatpush1.msra.mxu0 0.0
      %408 = vmatprep.subr.mxu0 0.0
      %409 = vmatpush1.msra.mxu0 0.0
      %410 = vmatprep.subr.mxu0 0.0
      %411 = vmatpush1.msra.mxu0 0.0
      %412 = vmatprep.subr.mxu0 0.0
      %413 = vmatpush1.msra.mxu0 0.0
      %414 = vmatprep.subr.mxu0 0.0
      %415 = vmatpush1.msra.mxu0 0.0
      %416 = vmatprep.subr.mxu0 0.0
      %417 = vmatpush1.msra.mxu0 0.0
      %418 = vmatprep.subr.mxu0 0.0
      %419 = vmatpush1.msra.mxu0 0.0
      %420 = vmatprep.subr.mxu0 0.0
      %421 = vmatpush1.msra.mxu0 0.0
      %422 = vmatprep.subr.mxu0 0.0
      %423 = vmatpush1.msra.mxu0 0.0
      %424 = vmatprep.subr.mxu0 0.0
      %425 = vmatpush1.msra.mxu0 0.0
      %426 = vmatprep.subr.mxu0 0.0
      %427 = vmatpush1.msra.mxu0 0.0
      %428 = vmatprep.subr.mxu0 0.0
      %429 = vmatpush1.msra.mxu0 0.0
      %430 = vmatprep.subr.mxu0 0.0
      %431 = vmatpush1.msra.mxu0 0.0
      %432 = vmatprep.subr.mxu0 0.0
      %433 = vmatpush1.msra.mxu0 0.0
      %434 = vmatprep.subr.mxu0 0.0
      %435 = vmatpush1.msra.mxu0 0.0
      %436 = vmatprep.subr.mxu0 0.0
      %437 = vmatpush1.msra.mxu0 0.0
      %438 = vmatprep.subr.mxu0 0.0
      %439 = vmatpush1.msra.mxu0 0.0
      %440 = vmatprep.subr.mxu0 0.0
      %441 = vmatpush1.msra.mxu0 0.0
      %442 = vmatprep.mubr.f32.mxu0 0.0
      %443 = vmatmul.mubr.f32.gmra.mrb[0].mxu0 %v355
      %v444 = vpop.f32.mrb[0].mxu0
      %v445 = vadd.f32 %v351, %v444
      %v446 = vpop.f32.mrb[0].mxu0
      %447 = vmatprep.mubr.f32.mxu0 0.0
      %448 = vmatmul.mubr.f32.gmra.mrb[0].mxu0 %v358
      %v449 = vpop.f32.mrb[0].mxu0
      %v450 = vadd.f32 %v351, %v449
      %v451 = vpop.f32.mrb[0].mxu0
      %452 = vmatprep.mubr.f32.mxu0 0.0
      %453 = vmatmul.mubr.f32.gmra.mrb[0].mxu0 %v361
      %v454 = vpop.f32.mrb[0].mxu0
      %v455 = vadd.f32 %v351, %v454
      %v456 = vpop.f32.mrb[0].mxu0
      %457 = vmatprep.mubr.f32.mxu0 0.0
      %458 = vmatmul.mubr.f32.gmra.mrb[0].mxu0 %v364
      %v459 = vpop.f32.mrb[0].mxu0
      %v460 = vadd.f32 %v351, %v459
      %v461 = vpop.f32.mrb[0].mxu0
      %462 = vmatprep.mubr.f32.mxu0 0.0
      %463 = vmatmul.mubr.f32.gmra.mrb[0].mxu0 %v367
      %v464 = vpop.f32.mrb[0].mxu0
      %v465 = vadd.f32 %v351, %v464
      %v466 = vpop.f32.mrb[0].mxu0
      %467 = vmatprep.mubr.f32.mxu0 0.0
      %468 = vmatmul.mubr.f32.gmra.mrb[0].mxu0 %v370
      %v469 = vpop.f32.mrb[0].mxu0
      %v470 = vadd.f32 %v351, %v469
      %v471 = vpop.f32.mrb[0].mxu0
      %472 = vmatprep.mubr.f32.mxu0 0.0
      %473 = vmatmul.mubr.f32.gmra.mrb[0].mxu0 %v373
      %v474 = vpop.f32.mrb[0].mxu0
      %v475 = vadd.f32 %v351, %v474
      %v476 = vpop.f32.mrb[0].mxu0
      %477 = vmatprep.mubr.f32.mxu0 0.0
      %478 = vmatmul.mubr.f32.gmra.mrb[0].mxu0 %v376
      %v479 = vpop.f32.mrb[0].mxu0
      %v480 = vadd.f32 %v351, %v479
      %v481 = vpop.f32.mrb[0].mxu0
      %482 = vdwg.mxu0
      %v483 = vld [vmem:[%s3] sm:$0xff]
      %v484 = vld [vmem:[%s3 + $0x8] sm:$0xff]
      %v485 = vld [vmem:[%s3 + $0x10] sm:$0xff]
      %v486 = vld [vmem:[%s3 + $0x18] sm:$0xff]
      %v487 = vld [vmem:[%s4] sm:$0x1]
      %v489 = vlaneseq
      %v490 = vshrl.u32 %v489, 7
      %v491 = vsub.s32 0, %v490
      %v492 = vrot.slane %v487, %v491
      %494 = vmatprep.subr.mxu0 0.0
      %495 = vmatpush1.msra.mxu0 %v483
      %496 = vmatprep.subr.mxu0 0.0
      %497 = vmatpush1.msra.mxu0 %v484
      %498 = vmatprep.subr.mxu0 0.0
      %499 = vmatpush1.msra.mxu0 %v485
      %500 = vmatprep.subr.mxu0 0.0
      %501 = vmatpush1.msra.mxu0 %v486
      %502 = vmatprep.subr.mxu0 0.0
      %503 = vmatpush1.msra.mxu0 0.0
      %504 = vmatprep.subr.mxu0 0.0
      %505 = vmatpush1.msra.mxu0 0.0
      %506 = vmatprep.subr.mxu0 0.0
      %507 = vmatpush1.msra.mxu0 0.0
      %508 = vmatprep.subr.mxu0 0.0
      %509 = vmatpush1.msra.mxu0 0.0
      %510 = vmatprep.subr.mxu0 0.0
      %511 = vmatpush1.msra.mxu0 0.0
      %512 = vmatprep.subr.mxu0 0.0
      %513 = vmatpush1.msra.mxu0 0.0
      %514 = vmatprep.subr.mxu0 0.0
      %515 = vmatpush1.msra.mxu0 0.0
      %516 = vmatprep.subr.mxu0 0.0
      %517 = vmatpush1.msra.mxu0 0.0
      %518 = vmatprep.subr.mxu0 0.0
      %519 = vmatpush1.msra.mxu0 0.0
      %520 = vmatprep.subr.mxu0 0.0
      %521 = vmatpush1.msra.mxu0 0.0
      %522 = vmatprep.subr.mxu0 0.0
      %523 = vmatpush1.msra.mxu0 0.0
      %524 = vmatprep.subr.mxu0 0.0
      %525 = vmatpush1.msra.mxu0 0.0
      %526 = vmatprep.subr.mxu0 0.0
      %527 = vmatpush1.msra.mxu0 0.0
      %528 = vmatprep.subr.mxu0 0.0
      %529 = vmatpush1.msra.mxu0 0.0
      %530 = vmatprep.subr.mxu0 0.0
      %531 = vmatpush1.msra.mxu0 0.0
      %532 = vmatprep.subr.mxu0 0.0
      %533 = vmatpush1.msra.mxu0 0.0
      %534 = vmatprep.subr.mxu0 0.0
      %535 = vmatpush1.msra.mxu0 0.0
      %536 = vmatprep.subr.mxu0 0.0
      %537 = vmatpush1.msra.mxu0 0.0
      %538 = vmatprep.subr.mxu0 0.0
      %539 = vmatpush1.msra.mxu0 0.0
      %540 = vmatprep.subr.mxu0 0.0
      %541 = vmatpush1.msra.mxu0 0.0
      %542 = vmatprep.subr.mxu0 0.0
      %543 = vmatpush1.msra.mxu0 0.0
      %544 = vmatprep.subr.mxu0 0.0
      %545 = vmatpush1.msra.mxu0 0.0
      %546 = vmatprep.subr.mxu0 0.0
      %547 = vmatpush1.msra.mxu0 0.0
      %548 = vmatprep.subr.mxu0 0.0
      %549 = vmatpush1.msra.mxu0 0.0
      %550 = vmatprep.subr.mxu0 0.0
      %551 = vmatpush1.msra.mxu0 0.0
      %552 = vmatprep.subr.mxu0 0.0
      %553 = vmatpush1.msra.mxu0 0.0
      %554 = vmatprep.subr.mxu0 0.0
      %555 = vmatpush1.msra.mxu0 0.0
      %556 = vmatprep.subr.mxu0 0.0
      %557 = vmatpush1.msra.mxu0 0.0
      %558 = vmatprep.mubr.f32.mxu0 0.0
      %559 = vmatmul.mubr.f32.gmra.mrb[0].mxu0 %v355
      %v560 = vpop.f32.mrb[0].mxu0
      %v561 = vadd.f32 %v492, %v560
      %v562 = vpop.f32.mrb[0].mxu0
      %563 = vmatprep.mubr.f32.mxu0 0.0
      %564 = vmatmul.mubr.f32.gmra.mrb[0].mxu0 %v358
      %v565 = vpop.f32.mrb[0].mxu0
      %v566 = vadd.f32 %v492, %v565
      %v567 = vpop.f32.mrb[0].mxu0
      %568 = vmatprep.mubr.f32.mxu0 0.0
      %569 = vmatmul.mubr.f32.gmra.mrb[0].mxu0 %v361
      %v570 = vpop.f32.mrb[0].mxu0
      %v571 = vadd.f32 %v492, %v570
      %v572 = vpop.f32.mrb[0].mxu0
      %573 = vmatprep.mubr.f32.mxu0 0.0
      %574 = vmatmul.mubr.f32.gmra.mrb[0].mxu0 %v364
      %v575 = vpop.f32.mrb[0].mxu0
      %v576 = vadd.f32 %v492, %v575
      %v577 = vpop.f32.mrb[0].mxu0
      %578 = vmatprep.mubr.f32.mxu0 0.0
      %579 = vmatmul.mubr.f32.gmra.mrb[0].mxu0 %v367
      %v580 = vpop.f32.mrb[0].mxu0
      %v581 = vadd.f32 %v492, %v580
      %v582 = vpop.f32.mrb[0].mxu0
      %583 = vmatprep.mubr.f32.mxu0 0.0
      %584 = vmatmul.mubr.f32.gmra.mrb[0].mxu0 %v370
      %v585 = vpop.f32.mrb[0].mxu0
      %v586 = vadd.f32 %v492, %v585
      %v587 = vpop.f32.mrb[0].mxu0
      %588 = vmatprep.mubr.f32.mxu0 0.0
      %589 = vmatmul.mubr.f32.gmra.mrb[0].mxu0 %v373
      %v590 = vpop.f32.mrb[0].mxu0
      %v591 = vadd.f32 %v492, %v590
      %v592 = vpop.f32.mrb[0].mxu0
      %593 = vmatprep.mubr.f32.mxu0 0.0
      %594 = vmatmul.mubr.f32.gmra.mrb[0].mxu0 %v376
      %v595 = vpop.f32.mrb[0].mxu0
      %v596 = vadd.f32 %v492, %v595
      %v597 = vpop.f32.mrb[0].mxu0
      %598 = vdwg.mxu0
      %v599 = vld [vmem:[%s5] sm:$0xff]
      %v600 = vld [vmem:[%s5 + $0x8] sm:$0xff]
      %v601 = vld [vmem:[%s5 + $0x10] sm:$0xff]
      %v602 = vld [vmem:[%s5 + $0x18] sm:$0xff]
      %v603 = vld [vmem:[%s6] sm:$0x1]
      %v605 = vlaneseq
      %v606 = vshrl.u32 %v605, 7
      %v607 = vsub.s32 0, %v606
      %v608 = vrot.slane %v603, %v607
      %610 = vmatprep.subr.mxu0 0.0
      %611 = vmatpush1.msra.mxu0 %v599
      %612 = vmatprep.subr.mxu0 0.0
      %613 = vmatpush1.msra.mxu0 %v600
      %614 = vmatprep.subr.mxu0 0.0
      %615 = vmatpush1.msra.mxu0 %v601
      %616 = vmatprep.subr.mxu0 0.0
      %617 = vmatpush1.msra.mxu0 %v602
      %618 = vmatprep.subr.mxu0 0.0
      %619 = vmatpush1.msra.mxu0 0.0
      %620 = vmatprep.subr.mxu0 0.0
      %621 = vmatpush1.msra.mxu0 0.0
      %622 = vmatprep.subr.mxu0 0.0
      %623 = vmatpush1.msra.mxu0 0.0
      %624 = vmatprep.subr.mxu0 0.0
      %625 = vmatpush1.msra.mxu0 0.0
      %626 = vmatprep.subr.mxu0 0.0
      %627 = vmatpush1.msra.mxu0 0.0
      %628 = vmatprep.subr.mxu0 0.0
      %629 = vmatpush1.msra.mxu0 0.0
      %630 = vmatprep.subr.mxu0 0.0
      %631 = vmatpush1.msra.mxu0 0.0
      %632 = vmatprep.subr.mxu0 0.0
      %633 = vmatpush1.msra.mxu0 0.0
      %634 = vmatprep.subr.mxu0 0.0
      %635 = vmatpush1.msra.mxu0 0.0
      %636 = vmatprep.subr.mxu0 0.0
      %637 = vmatpush1.msra.mxu0 0.0
      %638 = vmatprep.subr.mxu0 0.0
      %639 = vmatpush1.msra.mxu0 0.0
      %640 = vmatprep.subr.mxu0 0.0
      %641 = vmatpush1.msra.mxu0 0.0
      %642 = vmatprep.subr.mxu0 0.0
      %643 = vmatpush1.msra.mxu0 0.0
      %644 = vmatprep.subr.mxu0 0.0
      %645 = vmatpush1.msra.mxu0 0.0
      %646 = vmatprep.subr.mxu0 0.0
      %647 = vmatpush1.msra.mxu0 0.0
      %648 = vmatprep.subr.mxu0 0.0
      %649 = vmatpush1.msra.mxu0 0.0
      %650 = vmatprep.subr.mxu0 0.0
      %651 = vmatpush1.msra.mxu0 0.0
      %652 = vmatprep.subr.mxu0 0.0
      %653 = vmatpush1.msra.mxu0 0.0
      %654 = vmatprep.subr.mxu0 0.0
      %655 = vmatpush1.msra.mxu0 0.0
      %656 = vmatprep.subr.mxu0 0.0
      %657 = vmatpush1.msra.mxu0 0.0
      %658 = vmatprep.subr.mxu0 0.0
      %659 = vmatpush1.msra.mxu0 0.0
      %660 = vmatprep.subr.mxu0 0.0
      %661 = vmatpush1.msra.mxu0 0.0
      %662 = vmatprep.subr.mxu0 0.0
      %663 = vmatpush1.msra.mxu0 0.0
      %664 = vmatprep.subr.mxu0 0.0
      %665 = vmatpush1.msra.mxu0 0.0
      %666 = vmatprep.subr.mxu0 0.0
      %667 = vmatpush1.msra.mxu0 0.0
      %668 = vmatprep.subr.mxu0 0.0
      %669 = vmatpush1.msra.mxu0 0.0
      %670 = vmatprep.subr.mxu0 0.0
      %671 = vmatpush1.msra.mxu0 0.0
      %672 = vmatprep.subr.mxu0 0.0
      %673 = vmatpush1.msra.mxu0 0.0
      %674 = vmatprep.mubr.f32.mxu0 0.0
      %675 = vmatmul.mubr.f32.gmra.mrb[0].mxu0 %v355
      %v676 = vpop.f32.mrb[0].mxu0
      %v677 = vadd.f32 %v608, %v676
      %v678 = vpop.f32.mrb[0].mxu0
      %679 = vmatprep.mubr.f32.mxu0 0.0
      %680 = vmatmul.mubr.f32.gmra.mrb[0].mxu0 %v358
      %v681 = vpop.f32.mrb[0].mxu0
      %v682 = vadd.f32 %v608, %v681
      %v683 = vpop.f32.mrb[0].mxu0
      %684 = vmatprep.mubr.f32.mxu0 0.0
      %685 = vmatmul.mubr.f32.gmra.mrb[0].mxu0 %v361
      %v686 = vpop.f32.mrb[0].mxu0
      %v687 = vadd.f32 %v608, %v686
      %v688 = vpop.f32.mrb[0].mxu0
      %689 = vmatprep.mubr.f32.mxu0 0.0
      %690 = vmatmul.mubr.f32.gmra.mrb[0].mxu0 %v364
      %v691 = vpop.f32.mrb[0].mxu0
      %v692 = vadd.f32 %v608, %v691
      %v693 = vpop.f32.mrb[0].mxu0
      %694 = vmatprep.mubr.f32.mxu0 0.0
      %695 = vmatmul.mubr.f32.gmra.mrb[0].mxu0 %v367
      %v696 = vpop.f32.mrb[0].mxu0
      %v697 = vadd.f32 %v608, %v696
      %v698 = vpop.f32.mrb[0].mxu0
      %699 = vmatprep.mubr.f32.mxu0 0.0
      %700 = vmatmul.mubr.f32.gmra.mrb[0].mxu0 %v370
      %v701 = vpop.f32.mrb[0].mxu0
      %v702 = vadd.f32 %v608, %v701
      %v703 = vpop.f32.mrb[0].mxu0
      %704 = vmatprep.mubr.f32.mxu0 0.0
      %705 = vmatmul.mubr.f32.gmra.mrb[0].mxu0 %v373
      %v706 = vpop.f32.mrb[0].mxu0
      %v707 = vadd.f32 %v608, %v706
      %v708 = vpop.f32.mrb[0].mxu0
      %709 = vmatprep.mubr.f32.mxu0 0.0
      %710 = vmatmul.mubr.f32.gmra.mrb[0].mxu0 %v376
      %v711 = vpop.f32.mrb[0].mxu0
      %v712 = vadd.f32 %v608, %v711
      %v713 = vpop.f32.mrb[0].mxu0
      %714 = vdwg.mxu0
      %vm715 = vcmask 130048
      %v717 = vsel %vm715, %v445, 0
      %v720 = vsel %vm715, %v450, 0
      %v723 = vsel %vm715, %v455, 0
      %v726 = vsel %vm715, %v460, 0
      %v729 = vsel %vm715, %v465, 0
      %v732 = vsel %vm715, %v470, 0
      %v735 = vsel %vm715, %v475, 0
      %v738 = vsel %vm715, %v480, 0
      %v741 = vsel %vm715, %v561, 0
      %v744 = vsel %vm715, %v566, 0
      %v747 = vsel %vm715, %v571, 0
      %v750 = vsel %vm715, %v576, 0
      %v753 = vsel %vm715, %v581, 0
      %v756 = vsel %vm715, %v586, 0
      %v759 = vsel %vm715, %v591, 0
      %v762 = vsel %vm715, %v596, 0
      %764 = vmatprep.subr.mxu0 0.0
      %765 = vmatpush1.xpose.msra.mxu0 %v741
      %766 = vmatprep.subr.mxu0 0.0
      %767 = vmatpush1.xpose.msra.mxu0 %v744
      %768 = vmatprep.subr.mxu0 0.0
      %769 = vmatpush1.xpose.msra.mxu0 %v747
      %770 = vmatprep.subr.mxu0 0.0
      %771 = vmatpush1.xpose.msra.mxu0 %v750
      %772 = vmatprep.subr.mxu0 0.0
      %773 = vmatpush1.xpose.msra.mxu0 %v753
      %774 = vmatprep.subr.mxu0 0.0
      %775 = vmatpush1.xpose.msra.mxu0 %v756
      %776 = vmatprep.subr.mxu0 0.0
      %777 = vmatpush1.xpose.msra.mxu0 %v759
      %778 = vmatprep.subr.mxu0 0.0
      %779 = vmatpush1.xpose.msra.mxu0 %v762
      %780 = vmatprep.subr.mxu0 0.0
      %781 = vmatpush1.xpose.msra.mxu0 0.0
      %782 = vmatprep.subr.mxu0 0.0
      %783 = vmatpush1.xpose.msra.mxu0 0.0
      %784 = vmatprep.subr.mxu0 0.0
      %785 = vmatpush1.xpose.msra.mxu0 0.0
      %786 = vmatprep.subr.mxu0 0.0
      %787 = vmatpush1.xpose.msra.mxu0 0.0
      %788 = vmatprep.subr.mxu0 0.0
      %789 = vmatpush1.xpose.msra.mxu0 0.0
      %790 = vmatprep.subr.mxu0 0.0
      %791 = vmatpush1.xpose.msra.mxu0 0.0
      %792 = vmatprep.subr.mxu0 0.0
      %793 = vmatpush1.xpose.msra.mxu0 0.0
      %794 = vmatprep.subr.mxu0 0.0
      %795 = vmatpush1.xpose.msra.mxu0 0.0
      %796 = vmatprep.subr.mxu0 0.0
      %797 = vmatpush1.xpose.msra.mxu0 0.0
      %798 = vmatprep.subr.mxu0 0.0
      %799 = vmatpush1.xpose.msra.mxu0 0.0
      %800 = vmatprep.subr.mxu0 0.0
      %801 = vmatpush1.xpose.msra.mxu0 0.0
      %802 = vmatprep.subr.mxu0 0.0
      %803 = vmatpush1.xpose.msra.mxu0 0.0
      %804 = vmatprep.subr.mxu0 0.0
      %805 = vmatpush1.xpose.msra.mxu0 0.0
      %806 = vmatprep.subr.mxu0 0.0
      %807 = vmatpush1.xpose.msra.mxu0 0.0
      %808 = vmatprep.subr.mxu0 0.0
      %809 = vmatpush1.xpose.msra.mxu0 0.0
      %810 = vmatprep.subr.mxu0 0.0
      %811 = vmatpush1.xpose.msra.mxu0 0.0
      %812 = vmatprep.subr.mxu0 0.0
      %813 = vmatpush1.xpose.msra.mxu0 0.0
      %814 = vmatprep.subr.mxu0 0.0
      %815 = vmatpush1.xpose.msra.mxu0 0.0
      %816 = vmatprep.subr.mxu0 0.0
      %817 = vmatpush1.xpose.msra.mxu0 0.0
      %818 = vmatprep.subr.mxu0 0.0
      %819 = vmatpush1.xpose.msra.mxu0 0.0
      %820 = vmatprep.subr.mxu0 0.0
      %821 = vmatpush1.xpose.msra.mxu0 0.0
      %822 = vmatprep.subr.mxu0 0.0
      %823 = vmatpush1.xpose.msra.mxu0 0.0
      %824 = vmatprep.subr.mxu0 0.0
      %825 = vmatpush1.xpose.msra.mxu0 0.0
      %826 = vmatprep.subr.mxu0 0.0
      %827 = vmatpush1.xpose.msra.mxu0 0.0
      %828 = vmatprep.mubr.f32.mxu0 0.0
      %829 = vmatmul.mubr.f32.gmra.mrb[0].mxu0 %v717
      %v830 = vpop.f32.mrb[0].mxu0
      %v831 = vadd.f32 0.0, %v830
      %v832 = vpop.f32.mrb[0].mxu0
      %833 = vmatprep.mubr.f32.mxu0 0.0
      %834 = vmatmul.mubr.f32.gmra.mrb[0].mxu0 %v720
      %v835 = vpop.f32.mrb[0].mxu0
      %v836 = vadd.f32 0.0, %v835
      %v837 = vpop.f32.mrb[0].mxu0
      %838 = vmatprep.mubr.f32.mxu0 0.0
      %839 = vmatmul.mubr.f32.gmra.mrb[0].mxu0 %v723
      %v840 = vpop.f32.mrb[0].mxu0
      %v841 = vadd.f32 0.0, %v840
      %v842 = vpop.f32.mrb[0].mxu0
      %843 = vmatprep.mubr.f32.mxu0 0.0
      %844 = vmatmul.mubr.f32.gmra.mrb[0].mxu0 %v726
      %v845 = vpop.f32.mrb[0].mxu0
      %v846 = vadd.f32 0.0, %v845
      %v847 = vpop.f32.mrb[0].mxu0
      %848 = vmatprep.mubr.f32.mxu0 0.0
      %849 = vmatmul.mubr.f32.gmra.mrb[0].mxu0 %v729
      %v850 = vpop.f32.mrb[0].mxu0
      %v851 = vadd.f32 0.0, %v850
      %v852 = vpop.f32.mrb[0].mxu0
      %853 = vmatprep.mubr.f32.mxu0 0.0
      %854 = vmatmul.mubr.f32.gmra.mrb[0].mxu0 %v732
      %v855 = vpop.f32.mrb[0].mxu0
      %v856 = vadd.f32 0.0, %v855
      %v857 = vpop.f32.mrb[0].mxu0
      %858 = vmatprep.mubr.f32.mxu0 0.0
      %859 = vmatmul.mubr.f32.gmra.mrb[0].mxu0 %v735
      %v860 = vpop.f32.mrb[0].mxu0
      %v861 = vadd.f32 0.0, %v860
      %v862 = vpop.f32.mrb[0].mxu0
      %863 = vmatprep.mubr.f32.mxu0 0.0
      %864 = vmatmul.mubr.f32.gmra.mrb[0].mxu0 %v738
      %v865 = vpop.f32.mrb[0].mxu0
      %v866 = vadd.f32 0.0, %v865
      %v867 = vpop.f32.mrb[0].mxu0
      %868 = vdwg.mxu0
      %vm869 = vcmask 523264
      %v870 = vsel %vm869, %v831, -inf
      %871 = vmax.xlane.f32.xlu0 %v870
      %v872 = vpop.xlane.xlu0 %871
      %v873 = vsel %vm869, %v836, -inf
      %874 = vmax.xlane.f32.xlu0 %v873
      %v875 = vpop.xlane.xlu0 %874
      %v876 = vsel %vm869, %v841, -inf
      %877 = vmax.xlane.f32.xlu0 %v876
      %v878 = vpop.xlane.xlu0 %877
      %v879 = vsel %vm869, %v846, -inf
      %880 = vmax.xlane.f32.xlu0 %v879
      %v881 = vpop.xlane.xlu0 %880
      %v882 = vsel %vm869, %v851, -inf
      %883 = vmax.xlane.f32.xlu0 %v882
      %v884 = vpop.xlane.xlu0 %883
      %v885 = vsel %vm869, %v856, -inf
      %886 = vmax.xlane.f32.xlu0 %v885
      %v887 = vpop.xlane.xlu0 %886
      %v888 = vsel %vm869, %v861, -inf
      %889 = vmax.xlane.f32.xlu0 %v888
      %v890 = vpop.xlane.xlu0 %889
      %v891 = vsel %vm869, %v866, -inf
      %892 = vmax.xlane.f32.xlu0 %v891
      %v893 = vpop.xlane.xlu0 %892
      %v894 = vsub.f32 %v831, %v872
      %v895 = vsub.f32 %v836, %v875
      %v896 = vsub.f32 %v841, %v878
      %v897 = vsub.f32 %v846, %v881
      %v898 = vsub.f32 %v851, %v884
      %v899 = vsub.f32 %v856, %v887
      %v900 = vsub.f32 %v861, %v890
      %v901 = vsub.f32 %v866, %v893
      %v902 = vmul.f32 %v894, 1.442695
      %v903 = vpow.pop %v902
      %v904 = vmul.f32 %v895, 1.442695
      %v905 = vpow.pop %v904
      %v906 = vmul.f32 %v896, 1.442695
      %v907 = vpow.pop %v906
      %v908 = vmul.f32 %v897, 1.442695
      %v909 = vpow.pop %v908
      %v910 = vmul.f32 %v898, 1.442695
      %v911 = vpow.pop %v910
      %v912 = vmul.f32 %v899, 1.442695
      %v913 = vpow.pop %v912
      %v914 = vmul.f32 %v900, 1.442695
      %v915 = vpow.pop %v914
      %v916 = vmul.f32 %v901, 1.442695
      %v917 = vpow.pop %v916
      %v918 = vsel %vm869, %v903, 0.0
      %919 = vadd.xlane.f32.xlu0 %v918
      %v920 = vpop.xlane.xlu0 %919
      %v921 = vsel %vm869, %v905, 0.0
      %922 = vadd.xlane.f32.xlu0 %v921
      %v923 = vpop.xlane.xlu0 %922
      %v924 = vsel %vm869, %v907, 0.0
      %925 = vadd.xlane.f32.xlu0 %v924
      %v926 = vpop.xlane.xlu0 %925
      %v927 = vsel %vm869, %v909, 0.0
      %928 = vadd.xlane.f32.xlu0 %v927
      %v929 = vpop.xlane.xlu0 %928
      %v930 = vsel %vm869, %v911, 0.0
      %931 = vadd.xlane.f32.xlu0 %v930
      %v932 = vpop.xlane.xlu0 %931
      %v933 = vsel %vm869, %v913, 0.0
      %934 = vadd.xlane.f32.xlu0 %v933
      %v935 = vpop.xlane.xlu0 %934
      %v936 = vsel %vm869, %v915, 0.0
      %937 = vadd.xlane.f32.xlu0 %v936
      %v938 = vpop.xlane.xlu0 %937
      %v939 = vsel %vm869, %v917, 0.0
      %940 = vadd.xlane.f32.xlu0 %v939
      %v941 = vpop.xlane.xlu0 %940
      %v942 = vrcp.pop %v920
      %v943 = vrcp.pop %v923
      %v944 = vrcp.pop %v926
      %v945 = vrcp.pop %v929
      %v946 = vrcp.pop %v932
      %v947 = vrcp.pop %v935
      %v948 = vrcp.pop %v938
      %v949 = vrcp.pop %v941
      %v950 = vmul.f32 %v903, %v942
      %v951 = vmul.f32 %v905, %v943
      %v952 = vmul.f32 %v907, %v944
      %v953 = vmul.f32 %v909, %v945
      %v954 = vmul.f32 %v911, %v946
      %v955 = vmul.f32 %v913, %v947
      %v956 = vmul.f32 %v915, %v948
      %v957 = vmul.f32 %v917, %v949
      %v959 = vsel %vm869, %v950, 0
      %v962 = vsel %vm869, %v951, 0
      %v965 = vsel %vm869, %v952, 0
      %v968 = vsel %vm869, %v953, 0
      %v971 = vsel %vm869, %v954, 0
      %v974 = vsel %vm869, %v955, 0
      %v977 = vsel %vm869, %v956, 0
      %v980 = vsel %vm869, %v957, 0
      %982 = vmatprep.subr.mxu0 0.0
      %983 = vmatpush1.msra.mxu0 %v677
      %984 = vmatprep.subr.mxu0 0.0
      %985 = vmatpush1.msra.mxu0 %v682
      %986 = vmatprep.subr.mxu0 0.0
      %987 = vmatpush1.msra.mxu0 %v687
      %988 = vmatprep.subr.mxu0 0.0
      %989 = vmatpush1.msra.mxu0 %v692
      %990 = vmatprep.subr.mxu0 0.0
      %991 = vmatpush1.msra.mxu0 %v697
      %992 = vmatprep.subr.mxu0 0.0
      %993 = vmatpush1.msra.mxu0 %v702
      %994 = vmatprep.subr.mxu0 0.0
      %995 = vmatpush1.msra.mxu0 %v707
      %996 = vmatprep.subr.mxu0 0.0
      %997 = vmatpush1.msra.mxu0 %v712
      %998 = vmatprep.subr.mxu0 0.0
      %999 = vmatpush1.msra.mxu0 0.0
      %1000 = vmatprep.subr.mxu0 0.0
      %1001 = vmatpush1.msra.mxu0 0.0
      %1002 = vmatprep.subr.mxu0 0.0
      %1003 = vmatpush1.msra.mxu0 0.0
      %1004 = vmatprep.subr.mxu0 0.0
      %1005 = vmatpush1.msra.mxu0 0.0
      %1006 = vmatprep.subr.mxu0 0.0
      %1007 = vmatpush1.msra.mxu0 0.0
      %1008 = vmatprep.subr.mxu0 0.0
      %1009 = vmatpush1.msra.mxu0 0.0
      %1010 = vmatprep.subr.mxu0 0.0
      %1011 = vmatpush1.msra.mxu0 0.0
      %1012 = vmatprep.subr.mxu0 0.0
      %1013 = vmatpush1.msra.mxu0 0.0
      %1014 = vmatprep.subr.mxu0 0.0
      %1015 = vmatpush1.msra.mxu0 0.0
      %1016 = vmatprep.subr.mxu0 0.0
      %1017 = vmatpush1.msra.mxu0 0.0
      %1018 = vmatprep.subr.mxu0 0.0
      %1019 = vmatpush1.msra.mxu0 0.0
      %1020 = vmatprep.subr.mxu0 0.0
      %1021 = vmatpush1.msra.mxu0 0.0
      %1022 = vmatprep.subr.mxu0 0.0
      %1023 = vmatpush1.msra.mxu0 0.0
      %1024 = vmatprep.subr.mxu0 0.0
      %1025 = vmatpush1.msra.mxu0 0.0
      %1026 = vmatprep.subr.mxu0 0.0
      %1027 = vmatpush1.msra.mxu0 0.0
      %1028 = vmatprep.subr.mxu0 0.0
      %1029 = vmatpush1.msra.mxu0 0.0
      %1030 = vmatprep.subr.mxu0 0.0
      %1031 = vmatpush1.msra.mxu0 0.0
      %1032 = vmatprep.subr.mxu0 0.0
      %1033 = vmatpush1.msra.mxu0 0.0
      %1034 = vmatprep.subr.mxu0 0.0
      %1035 = vmatpush1.msra.mxu0 0.0
      %1036 = vmatprep.subr.mxu0 0.0
      %1037 = vmatpush1.msra.mxu0 0.0
      %1038 = vmatprep.subr.mxu0 0.0
      %1039 = vmatpush1.msra.mxu0 0.0
      %1040 = vmatprep.subr.mxu0 0.0
      %1041 = vmatpush1.msra.mxu0 0.0
      %1042 = vmatprep.subr.mxu0 0.0
      %1043 = vmatpush1.msra.mxu0 0.0
      %1044 = vmatprep.subr.mxu0 0.0
      %1045 = vmatpush1.msra.mxu0 0.0
      %1046 = vmatprep.mubr.f32.mxu0 0.0
      %1047 = vmatmul.mubr.f32.gmra.mrb[0].mxu0 %v959
      %v1048 = vpop.f32.mrb[0].mxu0
      %v1049 = vadd.f32 0.0, %v1048
      %v1050 = vpop.f32.mrb[0].mxu0
      %1051 = vmatprep.mubr.f32.mxu0 0.0
      %1052 = vmatmul.mubr.f32.gmra.mrb[0].mxu0 %v962
      %v1053 = vpop.f32.mrb[0].mxu0
      %v1054 = vadd.f32 0.0, %v1053
      %v1055 = vpop.f32.mrb[0].mxu0
      %1056 = vmatprep.mubr.f32.mxu0 0.0
      %1057 = vmatmul.mubr.f32.gmra.mrb[0].mxu0 %v965
      %v1058 = vpop.f32.mrb[0].mxu0
      %v1059 = vadd.f32 0.0, %v1058
      %v1060 = vpop.f32.mrb[0].mxu0
      %1061 = vmatprep.mubr.f32.mxu0 0.0
      %1062 = vmatmul.mubr.f32.gmra.mrb[0].mxu0 %v968
      %v1063 = vpop.f32.mrb[0].mxu0
      %v1064 = vadd.f32 0.0, %v1063
      %v1065 = vpop.f32.mrb[0].mxu0
      %1066 = vmatprep.mubr.f32.mxu0 0.0
      %1067 = vmatmul.mubr.f32.gmra.mrb[0].mxu0 %v971
      %v1068 = vpop.f32.mrb[0].mxu0
      %v1069 = vadd.f32 0.0, %v1068
      %v1070 = vpop.f32.mrb[0].mxu0
      %1071 = vmatprep.mubr.f32.mxu0 0.0
      %1072 = vmatmul.mubr.f32.gmra.mrb[0].mxu0 %v974
      %v1073 = vpop.f32.mrb[0].mxu0
      %v1074 = vadd.f32 0.0, %v1073
      %v1075 = vpop.f32.mrb[0].mxu0
      %1076 = vmatprep.mubr.f32.mxu0 0.0
      %1077 = vmatmul.mubr.f32.gmra.mrb[0].mxu0 %v977
      %v1078 = vpop.f32.mrb[0].mxu0
      %v1079 = vadd.f32 0.0, %v1078
      %v1080 = vpop.f32.mrb[0].mxu0
      %1081 = vmatprep.mubr.f32.mxu0 0.0
      %1082 = vmatmul.mubr.f32.gmra.mrb[0].mxu0 %v980
      %v1083 = vpop.f32.mrb[0].mxu0
      %v1084 = vadd.f32 0.0, %v1083
      %v1085 = vpop.f32.mrb[0].mxu0
      %1086 = vdwg.mxu0
      %v1087 = vld [vmem:[%s7] sm:$0xff]
      %v1088 = vld [vmem:[%s7 + $0x8] sm:$0xff]
      %v1090 = vsel %vm715, %v1049, 0
      %v1093 = vsel %vm715, %v1054, 0
      %v1096 = vsel %vm715, %v1059, 0
      %v1099 = vsel %vm715, %v1064, 0
      %v1102 = vsel %vm715, %v1069, 0
      %v1105 = vsel %vm715, %v1074, 0
      %v1108 = vsel %vm715, %v1079, 0
      %v1111 = vsel %vm715, %v1084, 0
      %1113 = vmatprep.subr.mxu0 0.0
      %1114 = vmatpush1.msra.mxu0 %v1087
      %1115 = vmatprep.subr.mxu0 0.0
      %1116 = vmatpush1.msra.mxu0 %v1088
      %1117 = vmatprep.subr.mxu0 0.0
      %1118 = vmatpush1.msra.mxu0 0.0
      %1119 = vmatprep.subr.mxu0 0.0
      %1120 = vmatpush1.msra.mxu0 0.0
      %1121 = vmatprep.subr.mxu0 0.0
      %1122 = vmatpush1.msra.mxu0 0.0
      %1123 = vmatprep.subr.mxu0 0.0
      %1124 = vmatpush1.msra.mxu0 0.0
      %1125 = vmatprep.subr.mxu0 0.0
      %1126 = vmatpush1.msra.mxu0 0.0
      %1127 = vmatprep.subr.mxu0 0.0
      %1128 = vmatpush1.msra.mxu0 0.0
      %1129 = vmatprep.subr.mxu0 0.0
      %1130 = vmatpush1.msra.mxu0 0.0
      %1131 = vmatprep.subr.mxu0 0.0
      %1132 = vmatpush1.msra.mxu0 0.0
      %1133 = vmatprep.subr.mxu0 0.0
      %1134 = vmatpush1.msra.mxu0 0.0
      %1135 = vmatprep.subr.mxu0 0.0
      %1136 = vmatpush1.msra.mxu0 0.0
      %1137 = vmatprep.subr.mxu0 0.0
      %1138 = vmatpush1.msra.mxu0 0.0
      %1139 = vmatprep.subr.mxu0 0.0
      %1140 = vmatpush1.msra.mxu0 0.0
      %1141 = vmatprep.subr.mxu0 0.0
      %1142 = vmatpush1.msra.mxu0 0.0
      %1143 = vmatprep.subr.mxu0 0.0
      %1144 = vmatpush1.msra.mxu0 0.0
      %1145 = vmatprep.subr.mxu0 0.0
      %1146 = vmatpush1.msra.mxu0 0.0
      %1147 = vmatprep.subr.mxu0 0.0
      %1148 = vmatpush1.msra.mxu0 0.0
      %1149 = vmatprep.subr.mxu0 0.0
      %1150 = vmatpush1.msra.mxu0 0.0
      %1151 = vmatprep.subr.mxu0 0.0
      %1152 = vmatpush1.msra.mxu0 0.0
      %1153 = vmatprep.subr.mxu0 0.0
      %1154 = vmatpush1.msra.mxu0 0.0
      %1155 = vmatprep.subr.mxu0 0.0
      %1156 = vmatpush1.msra.mxu0 0.0
      %1157 = vmatprep.subr.mxu0 0.0
      %1158 = vmatpush1.msra.mxu0 0.0
      %1159 = vmatprep.subr.mxu0 0.0
      %1160 = vmatpush1.msra.mxu0 0.0
      %1161 = vmatprep.subr.mxu0 0.0
      %1162 = vmatpush1.msra.mxu0 0.0
      %1163 = vmatprep.subr.mxu0 0.0
      %1164 = vmatpush1.msra.mxu0 0.0
      %1165 = vmatprep.subr.mxu0 0.0
      %1166 = vmatpush1.msra.mxu0 0.0
      %1167 = vmatprep.subr.mxu0 0.0
      %1168 = vmatpush1.msra.mxu0 0.0
      %1169 = vmatprep.subr.mxu0 0.0
      %1170 = vmatpush1.msra.mxu0 0.0
      %1171 = vmatprep.subr.mxu0 0.0
      %1172 = vmatpush1.msra.mxu0 0.0
      %1173 = vmatprep.subr.mxu0 0.0
      %1174 = vmatpush1.msra.mxu0 0.0
      %1175 = vmatprep.subr.mxu0 0.0
      %1176 = vmatpush1.msra.mxu0 0.0
      %1177 = vmatprep.mubr.f32.mxu0 0.0
      %1178 = vmatmul.mubr.f32.gmra.mrb[0].mxu0 %v1090
      %v1179 = vpop.f32.mrb[0].mxu0
      %v1180 = vadd.f32 0.0, %v1179
      %v1181 = vpop.f32.mrb[0].mxu0
      %1182 = vmatprep.mubr.f32.mxu0 0.0
      %1183 = vmatmul.mubr.f32.gmra.mrb[0].mxu0 %v1093
      %v1184 = vpop.f32.mrb[0].mxu0
      %v1185 = vadd.f32 0.0, %v1184
      %v1186 = vpop.f32.mrb[0].mxu0
      %1187 = vmatprep.mubr.f32.mxu0 0.0
      %1188 = vmatmul.mubr.f32.gmra.mrb[0].mxu0 %v1096
      %v1189 = vpop.f32.mrb[0].mxu0
      %v1190 = vadd.f32 0.0, %v1189
      %v1191 = vpop.f32.mrb[0].mxu0
      %1192 = vmatprep.mubr.f32.mxu0 0.0
      %1193 = vmatmul.mubr.f32.gmra.mrb[0].mxu0 %v1099
      %v1194 = vpop.f32.mrb[0].mxu0
      %v1195 = vadd.f32 0.0, %v1194
      %v1196 = vpop.f32.mrb[0].mxu0
      %1197 = vmatprep.mubr.f32.mxu0 0.0
      %1198 = vmatmul.mubr.f32.gmra.mrb[0].mxu0 %v1102
      %v1199 = vpop.f32.mrb[0].mxu0
      %v1200 = vadd.f32 0.0, %v1199
      %v1201 = vpop.f32.mrb[0].mxu0
      %1202 = vmatprep.mubr.f32.mxu0 0.0
      %1203 = vmatmul.mubr.f32.gmra.mrb[0].mxu0 %v1105
      %v1204 = vpop.f32.mrb[0].mxu0
      %v1205 = vadd.f32 0.0, %v1204
      %v1206 = vpop.f32.mrb[0].mxu0
      %1207 = vmatprep.mubr.f32.mxu0 0.0
      %1208 = vmatmul.mubr.f32.gmra.mrb[0].mxu0 %v1108
      %v1209 = vpop.f32.mrb[0].mxu0
      %v1210 = vadd.f32 0.0, %v1209
      %v1211 = vpop.f32.mrb[0].mxu0
      %1212 = vmatprep.mubr.f32.mxu0 0.0
      %1213 = vmatmul.mubr.f32.gmra.mrb[0].mxu0 %v1111
      %v1214 = vpop.f32.mrb[0].mxu0
      %v1215 = vadd.f32 0.0, %v1214
      %v1216 = vpop.f32.mrb[0].mxu0
      %1217 = vdwg.mxu0
      %v1219 = vlaneseq
      %v1220 = vshrl.u32 %v1219, 7
      %v1221 = vsub.s32 0, %v1220
      %v1222 = vrot.slane %v341, %v1221
      %v1224 = vadd.f32 %v1222, %v1180
      %v1225 = vadd.f32 %v1222, %v1185
      %v1226 = vadd.f32 %v1222, %v1190
      %v1227 = vadd.f32 %v1222, %v1195
      %v1228 = vadd.f32 %v1222, %v1200
      %v1229 = vadd.f32 %v1222, %v1205
      %v1230 = vadd.f32 %v1222, %v1210
      %v1231 = vadd.f32 %v1222, %v1215
      %s1232 = scalar_lea.vmem %s1, 32
      %v1233 = vld [vmem:[%s1232] sm:$0xff]
      %v1234 = vld [vmem:[%s1232 + $0x8] sm:$0xff]
      %v1235 = vld [vmem:[%s1232 + $0x10] sm:$0xff]
      %v1236 = vld [vmem:[%s1232 + $0x18] sm:$0xff]
      %s1237 = scalar_lea.vmem %s2, 1
      %v1238 = vld [vmem:[%s1237] sm:$0x1]
      %v1240 = vlaneseq
      %v1241 = vshrl.u32 %v1240, 7
      %v1242 = vsub.s32 0, %v1241
      %v1243 = vrot.slane %v1238, %v1242
      %1245 = vmatprep.subr.mxu0 0.0
      %1246 = vmatpush1.msra.mxu0 %v1233
      %1247 = vmatprep.subr.mxu0 0.0
      %1248 = vmatpush1.msra.mxu0 %v1234
      %1249 = vmatprep.subr.mxu0 0.0
      %1250 = vmatpush1.msra.mxu0 %v1235
      %1251 = vmatprep.subr.mxu0 0.0
      %1252 = vmatpush1.msra.mxu0 %v1236
      %1253 = vmatprep.subr.mxu0 0.0
      %1254 = vmatpush1.msra.mxu0 0.0
      %1255 = vmatprep.subr.mxu0 0.0
      %1256 = vmatpush1.msra.mxu0 0.0
      %1257 = vmatprep.subr.mxu0 0.0
      %1258 = vmatpush1.msra.mxu0 0.0
      %1259 = vmatprep.subr.mxu0 0.0
      %1260 = vmatpush1.msra.mxu0 0.0
      %1261 = vmatprep.subr.mxu0 0.0
      %1262 = vmatpush1.msra.mxu0 0.0
      %1263 = vmatprep.subr.mxu0 0.0
      %1264 = vmatpush1.msra.mxu0 0.0
      %1265 = vmatprep.subr.mxu0 0.0
      %1266 = vmatpush1.msra.mxu0 0.0
      %1267 = vmatprep.subr.mxu0 0.0
      %1268 = vmatpush1.msra.mxu0 0.0
      %1269 = vmatprep.subr.mxu0 0.0
      %1270 = vmatpush1.msra.mxu0 0.0
      %1271 = vmatprep.subr.mxu0 0.0
      %1272 = vmatpush1.msra.mxu0 0.0
      %1273 = vmatprep.subr.mxu0 0.0
      %1274 = vmatpush1.msra.mxu0 0.0
      %1275 = vmatprep.subr.mxu0 0.0
      %1276 = vmatpush1.msra.mxu0 0.0
      %1277 = vmatprep.subr.mxu0 0.0
      %1278 = vmatpush1.msra.mxu0 0.0
      %1279 = vmatprep.subr.mxu0 0.0
      %1280 = vmatpush1.msra.mxu0 0.0
      %1281 = vmatprep.subr.mxu0 0.0
      %1282 = vmatpush1.msra.mxu0 0.0
      %1283 = vmatprep.subr.mxu0 0.0
      %1284 = vmatpush1.msra.mxu0 0.0
      %1285 = vmatprep.subr.mxu0 0.0
      %1286 = vmatpush1.msra.mxu0 0.0
      %1287 = vmatprep.subr.mxu0 0.0
      %1288 = vmatpush1.msra.mxu0 0.0
      %1289 = vmatprep.subr.mxu0 0.0
      %1290 = vmatpush1.msra.mxu0 0.0
      %1291 = vmatprep.subr.mxu0 0.0
      %1292 = vmatpush1.msra.mxu0 0.0
      %1293 = vmatprep.subr.mxu0 0.0
      %1294 = vmatpush1.msra.mxu0 0.0
      %1295 = vmatprep.subr.mxu0 0.0
      %1296 = vmatpush1.msra.mxu0 0.0
      %1297 = vmatprep.subr.mxu0 0.0
      %1298 = vmatpush1.msra.mxu0 0.0
      %1299 = vmatprep.subr.mxu0 0.0
      %1300 = vmatpush1.msra.mxu0 0.0
      %1301 = vmatprep.subr.mxu0 0.0
      %1302 = vmatpush1.msra.mxu0 0.0
      %1303 = vmatprep.subr.mxu0 0.0
      %1304 = vmatpush1.msra.mxu0 0.0
      %1305 = vmatprep.subr.mxu0 0.0
      %1306 = vmatpush1.msra.mxu0 0.0
      %1307 = vmatprep.subr.mxu0 0.0
      %1308 = vmatpush1.msra.mxu0 0.0
      %1309 = vmatprep.mubr.f32.mxu0 0.0
      %1310 = vmatmul.mubr.f32.gmra.mrb[0].mxu0 %v355
      %v1311 = vpop.f32.mrb[0].mxu0
      %v1312 = vadd.f32 %v1243, %v1311
      %v1313 = vpop.f32.mrb[0].mxu0
      %1314 = vmatprep.mubr.f32.mxu0 0.0
      %1315 = vmatmul.mubr.f32.gmra.mrb[0].mxu0 %v358
      %v1316 = vpop.f32.mrb[0].mxu0
      %v1317 = vadd.f32 %v1243, %v1316
      %v1318 = vpop.f32.mrb[0].mxu0
      %1319 = vmatprep.mubr.f32.mxu0 0.0
      %1320 = vmatmul.mubr.f32.gmra.mrb[0].mxu0 %v361
      %v1321 = vpop.f32.mrb[0].mxu0
      %v1322 = vadd.f32 %v1243, %v1321
      %v1323 = vpop.f32.mrb[0].mxu0
      %1324 = vmatprep.mubr.f32.mxu0 0.0
      %1325 = vmatmul.mubr.f32.gmra.mrb[0].mxu0 %v364
      %v1326 = vpop.f32.mrb[0].mxu0
      %v1327 = vadd.f32 %v1243, %v1326
      %v1328 = vpop.f32.mrb[0].mxu0
      %1329 = vmatprep.mubr.f32.mxu0 0.0
      %1330 = vmatmul.mubr.f32.gmra.mrb[0].mxu0 %v367
      %v1331 = vpop.f32.mrb[0].mxu0
      %v1332 = vadd.f32 %v1243, %v1331
      %v1333 = vpop.f32.mrb[0].mxu0
      %1334 = vmatprep.mubr.f32.mxu0 0.0
      %1335 = vmatmul.mubr.f32.gmra.mrb[0].mxu0 %v370
      %v1336 = vpop.f32.mrb[0].mxu0
      %v1337 = vadd.f32 %v1243, %v1336
      %v1338 = vpop.f32.mrb[0].mxu0
      %1339 = vmatprep.mubr.f32.mxu0 0.0
      %1340 = vmatmul.mubr.f32.gmra.mrb[0].mxu0 %v373
      %v1341 = vpop.f32.mrb[0].mxu0
      %v1342 = vadd.f32 %v1243, %v1341
      %v1343 = vpop.f32.mrb[0].mxu0
      %1344 = vmatprep.mubr.f32.mxu0 0.0
      %1345 = vmatmul.mubr.f32.gmra.mrb[0].mxu0 %v376
      %v1346 = vpop.f32.mrb[0].mxu0
      %v1347 = vadd.f32 %v1243, %v1346
      %v1348 = vpop.f32.mrb[0].mxu0
      %1349 = vdwg.mxu0
      %s1350 = scalar_lea.vmem %s3, 32
      %v1351 = vld [vmem:[%s1350] sm:$0xff]
      %v1352 = vld [vmem:[%s1350 + $0x8] sm:$0xff]
      %v1353 = vld [vmem:[%s1350 + $0x10] sm:$0xff]
      %v1354 = vld [vmem:[%s1350 + $0x18] sm:$0xff]
      %s1355 = scalar_lea.vmem %s4, 1
      %v1356 = vld [vmem:[%s1355] sm:$0x1]
      %v1358 = vlaneseq
      %v1359 = vshrl.u32 %v1358, 7
      %v1360 = vsub.s32 0, %v1359
      %v1361 = vrot.slane %v1356, %v1360
      %1363 = vmatprep.subr.mxu0 0.0
      %1364 = vmatpush1.msra.mxu0 %v1351
      %1365 = vmatprep.subr.mxu0 0.0
      %1366 = vmatpush1.msra.mxu0 %v1352
      %1367 = vmatprep.subr.mxu0 0.0
      %1368 = vmatpush1.msra.mxu0 %v1353
      %1369 = vmatprep.subr.mxu0 0.0
      %1370 = vmatpush1.msra.mxu0 %v1354
      %1371 = vmatprep.subr.mxu0 0.0
      %1372 = vmatpush1.msra.mxu0 0.0
      %1373 = vmatprep.subr.mxu0 0.0
      %1374 = vmatpush1.msra.mxu0 0.0
      %1375 = vmatprep.subr.mxu0 0.0
      %1376 = vmatpush1.msra.mxu0 0.0
      %1377 = vmatprep.subr.mxu0 0.0
      %1378 = vmatpush1.msra.mxu0 0.0
      %1379 = vmatprep.subr.mxu0 0.0
      %1380 = vmatpush1.msra.mxu0 0.0
      %1381 = vmatprep.subr.mxu0 0.0
      %1382 = vmatpush1.msra.mxu0 0.0
      %1383 = vmatprep.subr.mxu0 0.0
      %1384 = vmatpush1.msra.mxu0 0.0
      %1385 = vmatprep.subr.mxu0 0.0
      %1386 = vmatpush1.msra.mxu0 0.0
      %1387 = vmatprep.subr.mxu0 0.0
      %1388 = vmatpush1.msra.mxu0 0.0
      %1389 = vmatprep.subr.mxu0 0.0
      %1390 = vmatpush1.msra.mxu0 0.0
      %1391 = vmatprep.subr.mxu0 0.0
      %1392 = vmatpush1.msra.mxu0 0.0
      %1393 = vmatprep.subr.mxu0 0.0
      %1394 = vmatpush1.msra.mxu0 0.0
      %1395 = vmatprep.subr.mxu0 0.0
      %1396 = vmatpush1.msra.mxu0 0.0
      %1397 = vmatprep.subr.mxu0 0.0
      %1398 = vmatpush1.msra.mxu0 0.0
      %1399 = vmatprep.subr.mxu0 0.0
      %1400 = vmatpush1.msra.mxu0 0.0
      %1401 = vmatprep.subr.mxu0 0.0
      %1402 = vmatpush1.msra.mxu0 0.0
      %1403 = vmatprep.subr.mxu0 0.0
      %1404 = vmatpush1.msra.mxu0 0.0
      %1405 = vmatprep.subr.mxu0 0.0
      %1406 = vmatpush1.msra.mxu0 0.0
      %1407 = vmatprep.subr.mxu0 0.0
      %1408 = vmatpush1.msra.mxu0 0.0
      %1409 = vmatprep.subr.mxu0 0.0
      %1410 = vmatpush1.msra.mxu0 0.0
      %1411 = vmatprep.subr.mxu0 0.0
      %1412 = vmatpush1.msra.mxu0 0.0
      %1413 = vmatprep.subr.mxu0 0.0
      %1414 = vmatpush1.msra.mxu0 0.0
      %1415 = vmatprep.subr.mxu0 0.0
      %1416 = vmatpush1.msra.mxu0 0.0
      %1417 = vmatprep.subr.mxu0 0.0
      %1418 = vmatpush1.msra.mxu0 0.0
      %1419 = vmatprep.subr.mxu0 0.0
      %1420 = vmatpush1.msra.mxu0 0.0
      %1421 = vmatprep.subr.mxu0 0.0
      %1422 = vmatpush1.msra.mxu0 0.0
      %1423 = vmatprep.subr.mxu0 0.0
      %1424 = vmatpush1.msra.mxu0 0.0
      %1425 = vmatprep.subr.mxu0 0.0
      %1426 = vmatpush1.msra.mxu0 0.0
      %1427 = vmatprep.mubr.f32.mxu0 0.0
      %1428 = vmatmul.mubr.f32.gmra.mrb[0].mxu0 %v355
      %v1429 = vpop.f32.mrb[0].mxu0
      %v1430 = vadd.f32 %v1361, %v1429
      %v1431 = vpop.f32.mrb[0].mxu0
      %1432 = vmatprep.mubr.f32.mxu0 0.0
      %1433 = vmatmul.mubr.f32.gmra.mrb[0].mxu0 %v358
      %v1434 = vpop.f32.mrb[0].mxu0
      %v1435 = vadd.f32 %v1361, %v1434
      %v1436 = vpop.f32.mrb[0].mxu0
      %1437 = vmatprep.mubr.f32.mxu0 0.0
      %1438 = vmatmul.mubr.f32.gmra.mrb[0].mxu0 %v361
      %v1439 = vpop.f32.mrb[0].mxu0
      %v1440 = vadd.f32 %v1361, %v1439
      %v1441 = vpop.f32.mrb[0].mxu0
      %1442 = vmatprep.mubr.f32.mxu0 0.0
      %1443 = vmatmul.mubr.f32.gmra.mrb[0].mxu0 %v364
      %v1444 = vpop.f32.mrb[0].mxu0
      %v1445 = vadd.f32 %v1361, %v1444
      %v1446 = vpop.f32.mrb[0].mxu0
      %1447 = vmatprep.mubr.f32.mxu0 0.0
      %1448 = vmatmul.mubr.f32.gmra.mrb[0].mxu0 %v367
      %v1449 = vpop.f32.mrb[0].mxu0
      %v1450 = vadd.f32 %v1361, %v1449
      %v1451 = vpop.f32.mrb[0].mxu0
      %1452 = vmatprep.mubr.f32.mxu0 0.0
      %1453 = vmatmul.mubr.f32.gmra.mrb[0].mxu0 %v370
      %v1454 = vpop.f32.mrb[0].mxu0
      %v1455 = vadd.f32 %v1361, %v1454
      %v1456 = vpop.f32.mrb[0].mxu0
      %1457 = vmatprep.mubr.f32.mxu0 0.0
      %1458 = vmatmul.mubr.f32.gmra.mrb[0].mxu0 %v373
      %v1459 = vpop.f32.mrb[0].mxu0
      %v1460 = vadd.f32 %v1361, %v1459
      %v1461 = vpop.f32.mrb[0].mxu0
      %1462 = vmatprep.mubr.f32.mxu0 0.0
      %1463 = vmatmul.mubr.f32.gmra.mrb[0].mxu0 %v376
      %v1464 = vpop.f32.mrb[0].mxu0
      %v1465 = vadd.f32 %v1361, %v1464
      %v1466 = vpop.f32.mrb[0].mxu0
      %1467 = vdwg.mxu0
      %s1468 = scalar_lea.vmem %s5, 32
      %v1469 = vld [vmem:[%s1468] sm:$0xff]
      %v1470 = vld [vmem:[%s1468 + $0x8] sm:$0xff]
      %v1471 = vld [vmem:[%s1468 + $0x10] sm:$0xff]
      %v1472 = vld [vmem:[%s1468 + $0x18] sm:$0xff]
      %s1473 = scalar_lea.vmem %s6, 1
      %v1474 = vld [vmem:[%s1473] sm:$0x1]
      %v1476 = vlaneseq
      %v1477 = vshrl.u32 %v1476, 7
      %v1478 = vsub.s32 0, %v1477
      %v1479 = vrot.slane %v1474, %v1478
      %1481 = vmatprep.subr.mxu0 0.0
      %1482 = vmatpush1.msra.mxu0 %v1469
      %1483 = vmatprep.subr.mxu0 0.0
      %1484 = vmatpush1.msra.mxu0 %v1470
      %1485 = vmatprep.subr.mxu0 0.0
      %1486 = vmatpush1.msra.mxu0 %v1471
      %1487 = vmatprep.subr.mxu0 0.0
      %1488 = vmatpush1.msra.mxu0 %v1472
      %1489 = vmatprep.subr.mxu0 0.0
      %1490 = vmatpush1.msra.mxu0 0.0
      %1491 = vmatprep.subr.mxu0 0.0
      %1492 = vmatpush1.msra.mxu0 0.0
      %1493 = vmatprep.subr.mxu0 0.0
      %1494 = vmatpush1.msra.mxu0 0.0
      %1495 = vmatprep.subr.mxu0 0.0
      %1496 = vmatpush1.msra.mxu0 0.0
      %1497 = vmatprep.subr.mxu0 0.0
      %1498 = vmatpush1.msra.mxu0 0.0
      %1499 = vmatprep.subr.mxu0 0.0
      %1500 = vmatpush1.msra.mxu0 0.0
      %1501 = vmatprep.subr.mxu0 0.0
      %1502 = vmatpush1.msra.mxu0 0.0
      %1503 = vmatprep.subr.mxu0 0.0
      %1504 = vmatpush1.msra.mxu0 0.0
      %1505 = vmatprep.subr.mxu0 0.0
      %1506 = vmatpush1.msra.mxu0 0.0
      %1507 = vmatprep.subr.mxu0 0.0
      %1508 = vmatpush1.msra.mxu0 0.0
      %1509 = vmatprep.subr.mxu0 0.0
      %1510 = vmatpush1.msra.mxu0 0.0
      %1511 = vmatprep.subr.mxu0 0.0
      %1512 = vmatpush1.msra.mxu0 0.0
      %1513 = vmatprep.subr.mxu0 0.0
      %1514 = vmatpush1.msra.mxu0 0.0
      %1515 = vmatprep.subr.mxu0 0.0
      %1516 = vmatpush1.msra.mxu0 0.0
      %1517 = vmatprep.subr.mxu0 0.0
      %1518 = vmatpush1.msra.mxu0 0.0
      %1519 = vmatprep.subr.mxu0 0.0
      %1520 = vmatpush1.msra.mxu0 0.0
      %1521 = vmatprep.subr.mxu0 0.0
      %1522 = vmatpush1.msra.mxu0 0.0
      %1523 = vmatprep.subr.mxu0 0.0
      %1524 = vmatpush1.msra.mxu0 0.0
      %1525 = vmatprep.subr.mxu0 0.0
      %1526 = vmatpush1.msra.mxu0 0.0
      %1527 = vmatprep.subr.mxu0 0.0
      %1528 = vmatpush1.msra.mxu0 0.0
      %1529 = vmatprep.subr.mxu0 0.0
      %1530 = vmatpush1.msra.mxu0 0.0
      %1531 = vmatprep.subr.mxu0 0.0
      %1532 = vmatpush1.msra.mxu0 0.0
      %1533 = vmatprep.subr.mxu0 0.0
      %1534 = vmatpush1.msra.mxu0 0.0
      %1535 = vmatprep.subr.mxu0 0.0
      %1536 = vmatpush1.msra.mxu0 0.0
      %1537 = vmatprep.subr.mxu0 0.0
      %1538 = vmatpush1.msra.mxu0 0.0
      %1539 = vmatprep.subr.mxu0 0.0
      %1540 = vmatpush1.msra.mxu0 0.0
      %1541 = vmatprep.subr.mxu0 0.0
      %1542 = vmatpush1.msra.mxu0 0.0
      %1543 = vmatprep.subr.mxu0 0.0
      %1544 = vmatpush1.msra.mxu0 0.0
      %1545 = vmatprep.mubr.f32.mxu0 0.0
      %1546 = vmatmul.mubr.f32.gmra.mrb[0].mxu0 %v355
      %v1547 = vpop.f32.mrb[0].mxu0
      %v1548 = vadd.f32 %v1479, %v1547
      %v1549 = vpop.f32.mrb[0].mxu0
      %1550 = vmatprep.mubr.f32.mxu0 0.0
      %1551 = vmatmul.mubr.f32.gmra.mrb[0].mxu0 %v358
      %v1552 = vpop.f32.mrb[0].mxu0
      %v1553 = vadd.f32 %v1479, %v1552
      %v1554 = vpop.f32.mrb[0].mxu0
      %1555 = vmatprep.mubr.f32.mxu0 0.0
      %1556 = vmatmul.mubr.f32.gmra.mrb[0].mxu0 %v361
      %v1557 = vpop.f32.mrb[0].mxu0
      %v1558 = vadd.f32 %v1479, %v1557
      %v1559 = vpop.f32.mrb[0].mxu0
      %1560 = vmatprep.mubr.f32.mxu0 0.0
      %1561 = vmatmul.mubr.f32.gmra.mrb[0].mxu0 %v364
      %v1562 = vpop.f32.mrb[0].mxu0
      %v1563 = vadd.f32 %v1479, %v1562
      %v1564 = vpop.f32.mrb[0].mxu0
      %1565 = vmatprep.mubr.f32.mxu0 0.0
      %1566 = vmatmul.mubr.f32.gmra.mrb[0].mxu0 %v367
      %v1567 = vpop.f32.mrb[0].mxu0
      %v1568 = vadd.f32 %v1479, %v1567
      %v1569 = vpop.f32.mrb[0].mxu0
      %1570 = vmatprep.mubr.f32.mxu0 0.0
      %1571 = vmatmul.mubr.f32.gmra.mrb[0].mxu0 %v370
      %v1572 = vpop.f32.mrb[0].mxu0
      %v1573 = vadd.f32 %v1479, %v1572
      %v1574 = vpop.f32.mrb[0].mxu0
      %1575 = vmatprep.mubr.f32.mxu0 0.0
      %1576 = vmatmul.mubr.f32.gmra.mrb[0].mxu0 %v373
      %v1577 = vpop.f32.mrb[0].mxu0
      %v1578 = vadd.f32 %v1479, %v1577
      %v1579 = vpop.f32.mrb[0].mxu0
      %1580 = vmatprep.mubr.f32.mxu0 0.0
      %1581 = vmatmul.mubr.f32.gmra.mrb[0].mxu0 %v376
      %v1582 = vpop.f32.mrb[0].mxu0
      %v1583 = vadd.f32 %v1479, %v1582
      %v1584 = vpop.f32.mrb[0].mxu0
      %1585 = vdwg.mxu0
      %v1587 = vsel %vm715, %v1312, 0
      %v1590 = vsel %vm715, %v1317, 0
      %v1593 = vsel %vm715, %v1322, 0
      %v1596 = vsel %vm715, %v1327, 0
      %v1599 = vsel %vm715, %v1332, 0
      %v1602 = vsel %vm715, %v1337, 0
      %v1605 = vsel %vm715, %v1342, 0
      %v1608 = vsel %vm715, %v1347, 0
      %v1611 = vsel %vm715, %v1430, 0
      %v1614 = vsel %vm715, %v1435, 0
      %v1617 = vsel %vm715, %v1440, 0
      %v1620 = vsel %vm715, %v1445, 0
      %v1623 = vsel %vm715, %v1450, 0
      %v1626 = vsel %vm715, %v1455, 0
      %v1629 = vsel %vm715, %v1460, 0
      %v1632 = vsel %vm715, %v1465, 0
      %1634 = vmatprep.subr.mxu0 0.0
      %1635 = vmatpush1.xpose.msra.mxu0 %v1611
      %1636 = vmatprep.subr.mxu0 0.0
      %1637 = vmatpush1.xpose.msra.mxu0 %v1614
      %1638 = vmatprep.subr.mxu0 0.0
      %1639 = vmatpush1.xpose.msra.mxu0 %v1617
      %1640 = vmatprep.subr.mxu0 0.0
      %1641 = vmatpush1.xpose.msra.mxu0 %v1620
      %1642 = vmatprep.subr.mxu0 0.0
      %1643 = vmatpush1.xpose.msra.mxu0 %v1623
      %1644 = vmatprep.subr.mxu0 0.0
      %1645 = vmatpush1.xpose.msra.mxu0 %v1626
      %1646 = vmatprep.subr.mxu0 0.0
      %1647 = vmatpush1.xpose.msra.mxu0 %v1629
      %1648 = vmatprep.subr.mxu0 0.0
      %1649 = vmatpush1.xpose.msra.mxu0 %v1632
      %1650 = vmatprep.subr.mxu0 0.0
      %1651 = vmatpush1.xpose.msra.mxu0 0.0
      %1652 = vmatprep.subr.mxu0 0.0
      %1653 = vmatpush1.xpose.msra.mxu0 0.0
      %1654 = vmatprep.subr.mxu0 0.0
      %1655 = vmatpush1.xpose.msra.mxu0 0.0
      %1656 = vmatprep.subr.mxu0 0.0
      %1657 = vmatpush1.xpose.msra.mxu0 0.0
      %1658 = vmatprep.subr.mxu0 0.0
      %1659 = vmatpush1.xpose.msra.mxu0 0.0
      %1660 = vmatprep.subr.mxu0 0.0
      %1661 = vmatpush1.xpose.msra.mxu0 0.0
      %1662 = vmatprep.subr.mxu0 0.0
      %1663 = vmatpush1.xpose.msra.mxu0 0.0
      %1664 = vmatprep.subr.mxu0 0.0
      %1665 = vmatpush1.xpose.msra.mxu0 0.0
      %1666 = vmatprep.subr.mxu0 0.0
      %1667 = vmatpush1.xpose.msra.mxu0 0.0
      %1668 = vmatprep.subr.mxu0 0.0
      %1669 = vmatpush1.xpose.msra.mxu0 0.0
      %1670 = vmatprep.subr.mxu0 0.0
      %1671 = vmatpush1.xpose.msra.mxu0 0.0
      %1672 = vmatprep.subr.mxu0 0.0
      %1673 = vmatpush1.xpose.msra.mxu0 0.0
      %1674 = vmatprep.subr.mxu0 0.0
      %1675 = vmatpush1.xpose.msra.mxu0 0.0
      %1676 = vmatprep.subr.mxu0 0.0
      %1677 = vmatpush1.xpose.msra.mxu0 0.0
      %1678 = vmatprep.subr.mxu0 0.0
      %1679 = vmatpush1.xpose.msra.mxu0 0.0
      %1680 = vmatprep.subr.mxu0 0.0
      %1681 = vmatpush1.xpose.msra.mxu0 0.0
      %1682 = vmatprep.subr.mxu0 0.0
      %1683 = vmatpush1.xpose.msra.mxu0 0.0
      %1684 = vmatprep.subr.mxu0 0.0
      %1685 = vmatpush1.xpose.msra.mxu0 0.0
      %1686 = vmatprep.subr.mxu0 0.0
      %1687 = vmatpush1.xpose.msra.mxu0 0.0
      %1688 = vmatprep.subr.mxu0 0.0
      %1689 = vmatpush1.xpose.msra.mxu0 0.0
      %1690 = vmatprep.subr.mxu0 0.0
      %1691 = vmatpush1.xpose.msra.mxu0 0.0
      %1692 = vmatprep.subr.mxu0 0.0
      %1693 = vmatpush1.xpose.msra.mxu0 0.0
      %1694 = vmatprep.subr.mxu0 0.0
      %1695 = vmatpush1.xpose.msra.mxu0 0.0
      %1696 = vmatprep.subr.mxu0 0.0
      %1697 = vmatpush1.xpose.msra.mxu0 0.0
      %1698 = vmatprep.mubr.f32.mxu0 0.0
      %1699 = vmatmul.mubr.f32.gmra.mrb[0].mxu0 %v1587
      %v1700 = vpop.f32.mrb[0].mxu0
      %v1701 = vadd.f32 0.0, %v1700
      %v1702 = vpop.f32.mrb[0].mxu0
      %1703 = vmatprep.mubr.f32.mxu0 0.0
      %1704 = vmatmul.mubr.f32.gmra.mrb[0].mxu0 %v1590
      %v1705 = vpop.f32.mrb[0].mxu0
      %v1706 = vadd.f32 0.0, %v1705
      %v1707 = vpop.f32.mrb[0].mxu0
      %1708 = vmatprep.mubr.f32.mxu0 0.0
      %1709 = vmatmul.mubr.f32.gmra.mrb[0].mxu0 %v1593
      %v1710 = vpop.f32.mrb[0].mxu0
      %v1711 = vadd.f32 0.0, %v1710
      %v1712 = vpop.f32.mrb[0].mxu0
      %1713 = vmatprep.mubr.f32.mxu0 0.0
      %1714 = vmatmul.mubr.f32.gmra.mrb[0].mxu0 %v1596
      %v1715 = vpop.f32.mrb[0].mxu0
      %v1716 = vadd.f32 0.0, %v1715
      %v1717 = vpop.f32.mrb[0].mxu0
      %1718 = vmatprep.mubr.f32.mxu0 0.0
      %1719 = vmatmul.mubr.f32.gmra.mrb[0].mxu0 %v1599
      %v1720 = vpop.f32.mrb[0].mxu0
      %v1721 = vadd.f32 0.0, %v1720
      %v1722 = vpop.f32.mrb[0].mxu0
      %1723 = vmatprep.mubr.f32.mxu0 0.0
      %1724 = vmatmul.mubr.f32.gmra.mrb[0].mxu0 %v1602
      %v1725 = vpop.f32.mrb[0].mxu0
      %v1726 = vadd.f32 0.0, %v1725
      %v1727 = vpop.f32.mrb[0].mxu0
      %1728 = vmatprep.mubr.f32.mxu0 0.0
      %1729 = vmatmul.mubr.f32.gmra.mrb[0].mxu0 %v1605
      %v1730 = vpop.f32.mrb[0].mxu0
      %v1731 = vadd.f32 0.0, %v1730
      %v1732 = vpop.f32.mrb[0].mxu0
      %1733 = vmatprep.mubr.f32.mxu0 0.0
      %1734 = vmatmul.mubr.f32.gmra.mrb[0].mxu0 %v1608
      %v1735 = vpop.f32.mrb[0].mxu0
      %v1736 = vadd.f32 0.0, %v1735
      %v1737 = vpop.f32.mrb[0].mxu0
      %1738 = vdwg.mxu0
      %v1739 = vsel %vm869, %v1701, -inf
      %1740 = vmax.xlane.f32.xlu0 %v1739
      %v1741 = vpop.xlane.xlu0 %1740
      %v1742 = vsel %vm869, %v1706, -inf
      %1743 = vmax.xlane.f32.xlu0 %v1742
      %v1744 = vpop.xlane.xlu0 %1743
      %v1745 = vsel %vm869, %v1711, -inf
      %1746 = vmax.xlane.f32.xlu0 %v1745
      %v1747 = vpop.xlane.xlu0 %1746
      %v1748 = vsel %vm869, %v1716, -inf
      %1749 = vmax.xlane.f32.xlu0 %v1748
      %v1750 = vpop.xlane.xlu0 %1749
      %v1751 = vsel %vm869, %v1721, -inf
      %1752 = vmax.xlane.f32.xlu0 %v1751
      %v1753 = vpop.xlane.xlu0 %1752
      %v1754 = vsel %vm869, %v1726, -inf
      %1755 = vmax.xlane.f32.xlu0 %v1754
      %v1756 = vpop.xlane.xlu0 %1755
      %v1757 = vsel %vm869, %v1731, -inf
      %1758 = vmax.xlane.f32.xlu0 %v1757
      %v1759 = vpop.xlane.xlu0 %1758
      %v1760 = vsel %vm869, %v1736, -inf
      %1761 = vmax.xlane.f32.xlu0 %v1760
      %v1762 = vpop.xlane.xlu0 %1761
      %v1763 = vsub.f32 %v1701, %v1741
      %v1764 = vsub.f32 %v1706, %v1744
      %v1765 = vsub.f32 %v1711, %v1747
      %v1766 = vsub.f32 %v1716, %v1750
      %v1767 = vsub.f32 %v1721, %v1753
      %v1768 = vsub.f32 %v1726, %v1756
      %v1769 = vsub.f32 %v1731, %v1759
      %v1770 = vsub.f32 %v1736, %v1762
      %v1771 = vmul.f32 %v1763, 1.442695
      %v1772 = vpow.pop %v1771
      %v1773 = vmul.f32 %v1764, 1.442695
      %v1774 = vpow.pop %v1773
      %v1775 = vmul.f32 %v1765, 1.442695
      %v1776 = vpow.pop %v1775
      %v1777 = vmul.f32 %v1766, 1.442695
      %v1778 = vpow.pop %v1777
      %v1779 = vmul.f32 %v1767, 1.442695
      %v1780 = vpow.pop %v1779
      %v1781 = vmul.f32 %v1768, 1.442695
      %v1782 = vpow.pop %v1781
      %v1783 = vmul.f32 %v1769, 1.442695
      %v1784 = vpow.pop %v1783
      %v1785 = vmul.f32 %v1770, 1.442695
      %v1786 = vpow.pop %v1785
      %v1787 = vsel %vm869, %v1772, 0.0
      %1788 = vadd.xlane.f32.xlu0 %v1787
      %v1789 = vpop.xlane.xlu0 %1788
      %v1790 = vsel %vm869, %v1774, 0.0
      %1791 = vadd.xlane.f32.xlu0 %v1790
      %v1792 = vpop.xlane.xlu0 %1791
      %v1793 = vsel %vm869, %v1776, 0.0
      %1794 = vadd.xlane.f32.xlu0 %v1793
      %v1795 = vpop.xlane.xlu0 %1794
      %v1796 = vsel %vm869, %v1778, 0.0
      %1797 = vadd.xlane.f32.xlu0 %v1796
      %v1798 = vpop.xlane.xlu0 %1797
      %v1799 = vsel %vm869, %v1780, 0.0
      %1800 = vadd.xlane.f32.xlu0 %v1799
      %v1801 = vpop.xlane.xlu0 %1800
      %v1802 = vsel %vm869, %v1782, 0.0
      %1803 = vadd.xlane.f32.xlu0 %v1802
      %v1804 = vpop.xlane.xlu0 %1803
      %v1805 = vsel %vm869, %v1784, 0.0
      %1806 = vadd.xlane.f32.xlu0 %v1805
      %v1807 = vpop.xlane.xlu0 %1806
      %v1808 = vsel %vm869, %v1786, 0.0
      %1809 = vadd.xlane.f32.xlu0 %v1808
      %v1810 = vpop.xlane.xlu0 %1809
      %v1811 = vrcp.pop %v1789
      %v1812 = vrcp.pop %v1792
      %v1813 = vrcp.pop %v1795
      %v1814 = vrcp.pop %v1798
      %v1815 = vrcp.pop %v1801
      %v1816 = vrcp.pop %v1804
      %v1817 = vrcp.pop %v1807
      %v1818 = vrcp.pop %v1810
      %v1819 = vmul.f32 %v1772, %v1811
      %v1820 = vmul.f32 %v1774, %v1812
      %v1821 = vmul.f32 %v1776, %v1813
      %v1822 = vmul.f32 %v1778, %v1814
      %v1823 = vmul.f32 %v1780, %v1815
      %v1824 = vmul.f32 %v1782, %v1816
      %v1825 = vmul.f32 %v1784, %v1817
      %v1826 = vmul.f32 %v1786, %v1818
      %v1828 = vsel %vm869, %v1819, 0
      %v1831 = vsel %vm869, %v1820, 0
      %v1834 = vsel %vm869, %v1821, 0
      %v1837 = vsel %vm869, %v1822, 0
      %v1840 = vsel %vm869, %v1823, 0
      %v1843 = vsel %vm869, %v1824, 0
      %v1846 = vsel %vm869, %v1825, 0
      %v1849 = vsel %vm869, %v1826, 0
      %1851 = vmatprep.subr.mxu0 0.0
      %1852 = vmatpush1.msra.mxu0 %v1548
      %1853 = vmatprep.subr.mxu0 0.0
      %1854 = vmatpush1.msra.mxu0 %v1553
      %1855 = vmatprep.subr.mxu0 0.0
      %1856 = vmatpush1.msra.mxu0 %v1558
      %1857 = vmatprep.subr.mxu0 0.0
      %1858 = vmatpush1.msra.mxu0 %v1563
      %1859 = vmatprep.subr.mxu0 0.0
      %1860 = vmatpush1.msra.mxu0 %v1568
      %1861 = vmatprep.subr.mxu0 0.0
      %1862 = vmatpush1.msra.mxu0 %v1573
      %1863 = vmatprep.subr.mxu0 0.0
      %1864 = vmatpush1.msra.mxu0 %v1578
      %1865 = vmatprep.subr.mxu0 0.0
      %1866 = vmatpush1.msra.mxu0 %v1583
      %1867 = vmatprep.subr.mxu0 0.0
      %1868 = vmatpush1.msra.mxu0 0.0
      %1869 = vmatprep.subr.mxu0 0.0
      %1870 = vmatpush1.msra.mxu0 0.0
      %1871 = vmatprep.subr.mxu0 0.0
      %1872 = vmatpush1.msra.mxu0 0.0
      %1873 = vmatprep.subr.mxu0 0.0
      %1874 = vmatpush1.msra.mxu0 0.0
      %1875 = vmatprep.subr.mxu0 0.0
      %1876 = vmatpush1.msra.mxu0 0.0
      %1877 = vmatprep.subr.mxu0 0.0
      %1878 = vmatpush1.msra.mxu0 0.0
      %1879 = vmatprep.subr.mxu0 0.0
      %1880 = vmatpush1.msra.mxu0 0.0
      %1881 = vmatprep.subr.mxu0 0.0
      %1882 = vmatpush1.msra.mxu0 0.0
      %1883 = vmatprep.subr.mxu0 0.0
      %1884 = vmatpush1.msra.mxu0 0.0
      %1885 = vmatprep.subr.mxu0 0.0
      %1886 = vmatpush1.msra.mxu0 0.0
      %1887 = vmatprep.subr.mxu0 0.0
      %1888 = vmatpush1.msra.mxu0 0.0
      %1889 = vmatprep.subr.mxu0 0.0
      %1890 = vmatpush1.msra.mxu0 0.0
      %1891 = vmatprep.subr.mxu0 0.0
      %1892 = vmatpush1.msra.mxu0 0.0
      %1893 = vmatprep.subr.mxu0 0.0
      %1894 = vmatpush1.msra.mxu0 0.0
      %1895 = vmatprep.subr.mxu0 0.0
      %1896 = vmatpush1.msra.mxu0 0.0
      %1897 = vmatprep.subr.mxu0 0.0
      %1898 = vmatpush1.msra.mxu0 0.0
      %1899 = vmatprep.subr.mxu0 0.0
      %1900 = vmatpush1.msra.mxu0 0.0
      %1901 = vmatprep.subr.mxu0 0.0
      %1902 = vmatpush1.msra.mxu0 0.0
      %1903 = vmatprep.subr.mxu0 0.0
      %1904 = vmatpush1.msra.mxu0 0.0
      %1905 = vmatprep.subr.mxu0 0.0
      %1906 = vmatpush1.msra.mxu0 0.0
      %1907 = vmatprep.subr.mxu0 0.0
      %1908 = vmatpush1.msra.mxu0 0.0
      %1909 = vmatprep.subr.mxu0 0.0
      %1910 = vmatpush1.msra.mxu0 0.0
      %1911 = vmatprep.subr.mxu0 0.0
      %1912 = vmatpush1.msra.mxu0 0.0
      %1913 = vmatprep.subr.mxu0 0.0
      %1914 = vmatpush1.msra.mxu0 0.0
      %1915 = vmatprep.mubr.f32.mxu0 0.0
      %1916 = vmatmul.mubr.f32.gmra.mrb[0].mxu0 %v1828
      %v1917 = vpop.f32.mrb[0].mxu0
      %v1918 = vadd.f32 0.0, %v1917
      %v1919 = vpop.f32.mrb[0].mxu0
      %1920 = vmatprep.mubr.f32.mxu0 0.0
      %1921 = vmatmul.mubr.f32.gmra.mrb[0].mxu0 %v1831
      %v1922 = vpop.f32.mrb[0].mxu0
      %v1923 = vadd.f32 0.0, %v1922
      %v1924 = vpop.f32.mrb[0].mxu0
      %1925 = vmatprep.mubr.f32.mxu0 0.0
      %1926 = vmatmul.mubr.f32.gmra.mrb[0].mxu0 %v1834
      %v1927 = vpop.f32.mrb[0].mxu0
      %v1928 = vadd.f32 0.0, %v1927
      %v1929 = vpop.f32.mrb[0].mxu0
      %1930 = vmatprep.mubr.f32.mxu0 0.0
      %1931 = vmatmul.mubr.f32.gmra.mrb[0].mxu0 %v1837
      %v1932 = vpop.f32.mrb[0].mxu0
      %v1933 = vadd.f32 0.0, %v1932
      %v1934 = vpop.f32.mrb[0].mxu0
      %1935 = vmatprep.mubr.f32.mxu0 0.0
      %1936 = vmatmul.mubr.f32.gmra.mrb[0].mxu0 %v1840
      %v1937 = vpop.f32.mrb[0].mxu0
      %v1938 = vadd.f32 0.0, %v1937
      %v1939 = vpop.f32.mrb[0].mxu0
      %1940 = vmatprep.mubr.f32.mxu0 0.0
      %1941 = vmatmul.mubr.f32.gmra.mrb[0].mxu0 %v1843
      %v1942 = vpop.f32.mrb[0].mxu0
      %v1943 = vadd.f32 0.0, %v1942
      %v1944 = vpop.f32.mrb[0].mxu0
      %1945 = vmatprep.mubr.f32.mxu0 0.0
      %1946 = vmatmul.mubr.f32.gmra.mrb[0].mxu0 %v1846
      %v1947 = vpop.f32.mrb[0].mxu0
      %v1948 = vadd.f32 0.0, %v1947
      %v1949 = vpop.f32.mrb[0].mxu0
      %1950 = vmatprep.mubr.f32.mxu0 0.0
      %1951 = vmatmul.mubr.f32.gmra.mrb[0].mxu0 %v1849
      %v1952 = vpop.f32.mrb[0].mxu0
      %v1953 = vadd.f32 0.0, %v1952
      %v1954 = vpop.f32.mrb[0].mxu0
      %1955 = vdwg.mxu0
      %s1956 = scalar_lea.vmem %s7, 16
      %v1957 = vld [vmem:[%s1956] sm:$0xff]
      %v1958 = vld [vmem:[%s1956 + $0x8] sm:$0xff]
      %v1960 = vsel %vm715, %v1918, 0
      %v1963 = vsel %vm715, %v1923, 0
      %v1966 = vsel %vm715, %v1928, 0
      %v1969 = vsel %vm715, %v1933, 0
      %v1972 = vsel %vm715, %v1938, 0
      %v1975 = vsel %vm715, %v1943, 0
      %v1978 = vsel %vm715, %v1948, 0
      %v1981 = vsel %vm715, %v1953, 0
      %1983 = vmatprep.subr.mxu0 0.0
      %1984 = vmatpush1.msra.mxu0 %v1957
      %1985 = vmatprep.subr.mxu0 0.0
      %1986 = vmatpush1.msra.mxu0 %v1958
      %1987 = vmatprep.subr.mxu0 0.0
      %1988 = vmatpush1.msra.mxu0 0.0
      %1989 = vmatprep.subr.mxu0 0.0
      %1990 = vmatpush1.msra.mxu0 0.0
      %1991 = vmatprep.subr.mxu0 0.0
      %1992 = vmatpush1.msra.mxu0 0.0
      %1993 = vmatprep.subr.mxu0 0.0
      %1994 = vmatpush1.msra.mxu0 0.0
      %1995 = vmatprep.subr.mxu0 0.0
      %1996 = vmatpush1.msra.mxu0 0.0
      %1997 = vmatprep.subr.mxu0 0.0
      %1998 = vmatpush1.msra.mxu0 0.0
      %1999 = vmatprep.subr.mxu0 0.0
      %2000 = vmatpush1.msra.mxu0 0.0
      %2001 = vmatprep.subr.mxu0 0.0
      %2002 = vmatpush1.msra.mxu0 0.0
      %2003 = vmatprep.subr.mxu0 0.0
      %2004 = vmatpush1.msra.mxu0 0.0
      %2005 = vmatprep.subr.mxu0 0.0
      %2006 = vmatpush1.msra.mxu0 0.0
      %2007 = vmatprep.subr.mxu0 0.0
      %2008 = vmatpush1.msra.mxu0 0.0
      %2009 = vmatprep.subr.mxu0 0.0
      %2010 = vmatpush1.msra.mxu0 0.0
      %2011 = vmatprep.subr.mxu0 0.0
      %2012 = vmatpush1.msra.mxu0 0.0
      %2013 = vmatprep.subr.mxu0 0.0
      %2014 = vmatpush1.msra.mxu0 0.0
      %2015 = vmatprep.subr.mxu0 0.0
      %2016 = vmatpush1.msra.mxu0 0.0
      %2017 = vmatprep.subr.mxu0 0.0
      %2018 = vmatpush1.msra.mxu0 0.0
      %2019 = vmatprep.subr.mxu0 0.0
      %2020 = vmatpush1.msra.mxu0 0.0
      %2021 = vmatprep.subr.mxu0 0.0
      %2022 = vmatpush1.msra.mxu0 0.0
      %2023 = vmatprep.subr.mxu0 0.0
      %2024 = vmatpush1.msra.mxu0 0.0
      %2025 = vmatprep.subr.mxu0 0.0
      %2026 = vmatpush1.msra.mxu0 0.0
      %2027 = vmatprep.subr.mxu0 0.0
      %2028 = vmatpush1.msra.mxu0 0.0
      %2029 = vmatprep.subr.mxu0 0.0
      %2030 = vmatpush1.msra.mxu0 0.0
      %2031 = vmatprep.subr.mxu0 0.0
      %2032 = vmatpush1.msra.mxu0 0.0
      %2033 = vmatprep.subr.mxu0 0.0
      %2034 = vmatpush1.msra.mxu0 0.0
      %2035 = vmatprep.subr.mxu0 0.0
      %2036 = vmatpush1.msra.mxu0 0.0
      %2037 = vmatprep.subr.mxu0 0.0
      %2038 = vmatpush1.msra.mxu0 0.0
      %2039 = vmatprep.subr.mxu0 0.0
      %2040 = vmatpush1.msra.mxu0 0.0
      %2041 = vmatprep.subr.mxu0 0.0
      %2042 = vmatpush1.msra.mxu0 0.0
      %2043 = vmatprep.subr.mxu0 0.0
      %2044 = vmatpush1.msra.mxu0 0.0
      %2045 = vmatprep.subr.mxu0 0.0
      %2046 = vmatpush1.msra.mxu0 0.0
      %2047 = vmatprep.mubr.f32.mxu0 0.0
      %2048 = vmatmul.mubr.f32.gmra.mrb[0].mxu0 %v1960
      %v2049 = vpop.f32.mrb[0].mxu0
      %v2050 = vadd.f32 0.0, %v2049
      %v2051 = vpop.f32.mrb[0].mxu0
      %2052 = vmatprep.mubr.f32.mxu0 0.0
      %2053 = vmatmul.mubr.f32.gmra.mrb[0].mxu0 %v1963
      %v2054 = vpop.f32.mrb[0].mxu0
      %v2055 = vadd.f32 0.0, %v2054
      %v2056 = vpop.f32.mrb[0].mxu0
      %2057 = vmatprep.mubr.f32.mxu0 0.0
      %2058 = vmatmul.mubr.f32.gmra.mrb[0].mxu0 %v1966
      %v2059 = vpop.f32.mrb[0].mxu0
      %v2060 = vadd.f32 0.0, %v2059
      %v2061 = vpop.f32.mrb[0].mxu0
      %2062 = vmatprep.mubr.f32.mxu0 0.0
      %2063 = vmatmul.mubr.f32.gmra.mrb[0].mxu0 %v1969
      %v2064 = vpop.f32.mrb[0].mxu0
      %v2065 = vadd.f32 0.0, %v2064
      %v2066 = vpop.f32.mrb[0].mxu0
      %2067 = vmatprep.mubr.f32.mxu0 0.0
      %2068 = vmatmul.mubr.f32.gmra.mrb[0].mxu0 %v1972
      %v2069 = vpop.f32.mrb[0].mxu0
      %v2070 = vadd.f32 0.0, %v2069
      %v2071 = vpop.f32.mrb[0].mxu0
      %2072 = vmatprep.mubr.f32.mxu0 0.0
      %2073 = vmatmul.mubr.f32.gmra.mrb[0].mxu0 %v1975
      %v2074 = vpop.f32.mrb[0].mxu0
      %v2075 = vadd.f32 0.0, %v2074
      %v2076 = vpop.f32.mrb[0].mxu0
      %2077 = vmatprep.mubr.f32.mxu0 0.0
      %2078 = vmatmul.mubr.f32.gmra.mrb[0].mxu0 %v1978
      %v2079 = vpop.f32.mrb[0].mxu0
      %v2080 = vadd.f32 0.0, %v2079
      %v2081 = vpop.f32.mrb[0].mxu0
      %2082 = vmatprep.mubr.f32.mxu0 0.0
      %2083 = vmatmul.mubr.f32.gmra.mrb[0].mxu0 %v1981
      %v2084 = vpop.f32.mrb[0].mxu0
      %v2085 = vadd.f32 0.0, %v2084
      %v2086 = vpop.f32.mrb[0].mxu0
      %2087 = vdwg.mxu0
      %v2088 = vadd.f32 %v1224, %v2050
      %v2089 = vadd.f32 %v1225, %v2055
      %v2090 = vadd.f32 %v1226, %v2060
      %v2091 = vadd.f32 %v1227, %v2065
      %v2092 = vadd.f32 %v1228, %v2070
      %v2093 = vadd.f32 %v1229, %v2075
      %v2094 = vadd.f32 %v1230, %v2080
      %v2095 = vadd.f32 %v1231, %v2085
      %2096 = vst.msk [vmem:[%s332] sm:$0xff] %vm353, %v2088
      %2097 = vst.msk [vmem:[%s332 + $0x8] sm:$0xff] %vm353, %v2089
      %2098 = vst.msk [vmem:[%s332 + $0x10] sm:$0xff] %vm353, %v2090
      %2099 = vst.msk [vmem:[%s332 + $0x18] sm:$0xff] %vm353, %v2091
      %2100 = vst.msk [vmem:[%s332 + $0x20] sm:$0xff] %vm353, %v2092
      %2101 = vst.msk [vmem:[%s332 + $0x28] sm:$0xff] %vm353, %v2093
      %2102 = vst.msk [vmem:[%s332 + $0x30] sm:$0xff] %vm353, %v2094
      %2103 = vst.msk [vmem:[%s332 + $0x38] sm:$0xff] %vm353, %v2095
      %p2104 = scmp.lt.s32.totalorder %s20, 1
      %s2105 = scalar_select %p2104, %s20, 1
      %s2106 = smul.addr %s2105, 8
      %s2107 = smul.addr %s2106, 8
      %s2108 = scalar_lea.vmem %s9, %s2107
      // Predicated region
      $region57: #{tpu_custom_call.1} parent=55 // pred_check
        %p2109 = pneg %p232
      $region58: #{tpu_custom_call.1} parent=55 // pred_check_branch
        %2111 = sbr.rel (%p2109) target = $region60
      $region59: #{tpu_custom_call.1} parent=55 // pred_region
        _
      $region60: #{tpu_custom_call.1} parent=55 // pred_fallthru
        _
    $region56: #{tpu_custom_call.1} parent=5 // pred_fallthru
      _
    %p2112 = scmp.le.s32.totalorder 2, %s15
    // Predicated region
    $region61: #{tpu_custom_call.1} parent=5 // pred_check
      %p2113 = pneg %p2112
    $region62: #{tpu_custom_call.1} parent=5 // pred_check_branch
      %2115 = sbr.rel (%p2113) target = $region64
    $region63: #{tpu_custom_call.1} parent=5 // pred_region
      %s2116 = ssub.s32 %s15, 2
      // Predicated region
      $region65: #{tpu_custom_call.1} parent=63 // pred_check
        %p2117 = pneg %p238
      $region66: #{tpu_custom_call.1} parent=63 // pred_check_branch
        %2119 = sbr.rel (%p2117) target = $region68
      $region67: #{tpu_custom_call.1} parent=63 // pred_region
        %p2120 = scmp.lt.s32.totalorder %s21, 1
        %s2121 = scalar_select %p2120, %s21, 1
        %s2122 = smul.addr %s2121, 8
        %s2123 = smul.addr %s2122, 8
        %s2124 = scalar_lea.vmem %s9, %s2123
      $region68: #{tpu_custom_call.1} parent=63 // pred_fallthru
        _
    $region64: #{tpu_custom_call.1} parent=5 // pred_fallthru
      _
  $region6: #{tpu_custom_call.1} parent=0 // loop_footer
    %s19 = sadd.s32 1, %s15
  $region7: #{tpu_custom_call.1} parent=0 // loop_footer_branch
    %14 = sbr.rel target = $region3
  $region8: #{tpu_custom_call.1} parent=0 // loop_exit
    _

</llo_original>
